<compile_context>
chip_gen: v7x
topology: tpu7x:2x2x1
jax: 0.10.0
libtpu: 0.0.40
codegen_flags: <defaults>
</compile_context>

<pallas_src>
import jax
import jax.numpy as jnp
from jax.experimental import pallas as pl
from jax.experimental.pallas import tpu as pltpu


ROW_ALIGN = 16  # bf16 sublane-pack tile is (16, 128)


def _round_up(n, m):
    return ((n + m - 1) // m) * m


# ----------------------------------------------------------------------------
# Kernel
# ----------------------------------------------------------------------------
def make_airquality_kernel(*, B_pad, T, H, n_lstm, dense_in, layout, cols,
                           xproj_off):
    """Kernel closed over the static network structure / packed-buffer layout."""
    n_dense = len(dense_in)
    f32 = jnp.float32
    bf16 = jnp.bfloat16

    def kernel(buf_ref, out_ref):
        def wload(name, rows):
            off = layout[name]
            return buf_ref[off:off + rows, :]                  # bf16 (rows, cols)

        def bload(name):
            off = layout[name]
            row = buf_ref[off:off + 1, :].astype(f32)          # (1, cols)
            return jnp.broadcast_to(row, (B_pad, cols))        # hoisted, once

        # ---- hoisted parameter loads (stay resident in vregs) --------------
        w_hh0 = wload("w_hh0", H)                              # (H, cols) bf16
        w_ih_l, w_hh_l, b_l = [], [], []
        for l in range(1, n_lstm):
            w_ih_l.append(wload(f"w_ih{l}", H))
            w_hh_l.append(wload(f"w_hh{l}", H))
            b_l.append(bload(f"b{l}"))
        dw = [wload(f"dw{j}", dense_in[j]) for j in range(n_dense)]
        db = [bload(f"db{j}") for j in range(n_dense)]

        # Precomputed layer-0 projection (+ bias), cast to f32 once (hoisted).
        xproj = buf_ref[xproj_off:xproj_off + T * B_pad, :].astype(f32)

        h = [jnp.zeros((B_pad, H), f32) for _ in range(n_lstm)]
        c = [jnp.zeros((B_pad, H), f32) for _ in range(n_lstm)]

        def cell(gates, c_prev):
            # Whole-tensor nonlinearities (one sigmoid + one tanh per
            # layer-step), then slice the activated tensors.
            sg = jax.nn.sigmoid(gates)
            tg = jnp.tanh(gates)
            i_g = sg[:, 0 * H:1 * H]
            f_g = sg[:, 1 * H:2 * H]
            g_g = tg[:, 2 * H:3 * H]
            o_g = sg[:, 3 * H:4 * H]
            c_new = f_g * c_prev + i_g * g_g
            h_new = o_g * jnp.tanh(c_new)
            return h_new, c_new

        # Statically unrolled time loop (T is small).
        # TODO(synk): switch to lax.fori_loop(..., unroll=2..4) for large T.
        for t in range(T):
            # layer 0: input part precomputed, only the recurrent dot remains
            g0 = xproj[t * B_pad:(t + 1) * B_pad, :] + jnp.dot(
                h[0].astype(bf16), w_hh0, preferred_element_type=f32)
            h[0], c[0] = cell(g0, c[0])
            # layers >= 1: two dots (no per-step lane concat)
            for l in range(1, n_lstm):
                gl = (jnp.dot(h[l - 1].astype(bf16), w_ih_l[l - 1],
                              preferred_element_type=f32)
                      + jnp.dot(h[l].astype(bf16), w_hh_l[l - 1],
                                preferred_element_type=f32)
                      + b_l[l - 1])
                h[l], c[l] = cell(gl, c[l])
            # Inter-layer dropout is identity at inference (no-op).

        # ---- dense head: [ReLU -> (Dropout=id) -> Linear] repeated ---------
        feat = h[-1]                                           # (B_pad, H) f32
        for j in range(n_dense):
            feat = jnp.maximum(feat, 0.0)
            feat = jnp.dot(feat.astype(bf16), dw[j],
                           preferred_element_type=f32) + db[j]
            # no lane slice: padded feature columns are exactly zero and the
            # next weight's padded rows are zero -> contraction is exact.

        # Lane-dense (B_pad, cols=128) store; padded columns are exactly zero.
        out_ref[...] = feat

    return kernel


# ----------------------------------------------------------------------------
# Parameter packing (done ONCE, outside the per-call path)
# ----------------------------------------------------------------------------
def pack_params(params, lstm_size):
    """Packs all weights/biases into one (rows, cols) bf16 buffer.

    Every block starts at a 16-row-aligned offset (bf16 sublane tile).
    Padded weight/bias columns are exactly zero (invariant relied on by the
    dense head).  Layer-0 input weights/bias are returned separately for the
    XLA-side projection.
    """
    H = lstm_size
    G = 4 * H
    n_lstm = len(params["lstm"])
    dense = params["dense"]
    out_dims = [w.shape[0] for (w, _) in dense]
    cols = _round_up(max([G] + out_dims), 128)

    blocks, layout = [], {}
    off = 0

    def add(name, a):
        nonlocal off
        r, ccur = a.shape
        rr = _round_up(r, ROW_ALIGN)
        blk = jnp.zeros((rr, cols), jnp.float32).at[:r, :ccur].set(
            a.astype(jnp.float32))
        blocks.append(blk)
        layout[name] = off
        off += rr

    # LSTM layer 0: only the recurrent weight lives in the packed buffer.
    w_ih0, w_hh0, b_ih0, b_hh0 = params["lstm"][0]
    add("w_hh0", w_hh0.T)                                      # (H, 4H)

    # LSTM layers >= 1: separate W_ih / W_hh (no per-step concat), 1-row bias.
    for l in range(1, n_lstm):
        w_ih, w_hh, b_ih, b_hh = params["lstm"][l]
        add(f"w_ih{l}", w_ih.T)                                # (H, 4H)
        add(f"w_hh{l}", w_hh.T)                                # (H, 4H)
        add(f"b{l}", (b_ih + b_hh)[None, :])                   # (1, 4H)

    # Dense head.  Layer 0 contracts over exactly H rows; later layers get
    # their rows padded to `cols` so the kernel never lane-slices `feat`.
    dense_in = []
    for j, (w, b) in enumerate(dense):
        wt = jnp.asarray(w).T                                  # (in_j, out_j)
        if j == 0:
            rows = H
        else:
            rows = cols
            wt = jnp.zeros((cols, wt.shape[1]),
                           wt.dtype).at[:wt.shape[0], :].set(wt)
        dense_in.append(rows)
        add(f"dw{j}", wt)
        add(f"db{j}", b[None, :])                              # (1, out_j)

    p_buf = jnp.concatenate(blocks, axis=0).astype(jnp.bfloat16)
    w_ih0_T = jnp.asarray(w_ih0).T.astype(jnp.bfloat16)        # (F, 4H)
    b0 = (b_ih0 + b_hh0).astype(jnp.float32)                   # (4H,)
    return p_buf, layout, cols, dense_in, w_ih0_T, b0


# ----------------------------------------------------------------------------
# Forward builder (pack once, jit the forward)
# ----------------------------------------------------------------------------
def build_forward(params, lstm_size):
    p_buf, layout, cols, dense_in, w_ih0_T, b0 = pack_params(params, lstm_size)
    n_lstm = len(params["lstm"])
    out_size = params["dense"][-1][0].shape[0]
    H = lstm_size
    G = 4 * H
    p_rows = p_buf.shape[0]

    @jax.jit
    def forward(x, p_buf, w_ih0_T, b0):
        B, T, F = x.shape
        B_pad = _round_up(max(B, 8), 8)

        # Layer-0 input projection in XLA (fuses with transpose/pad); the
        # kernel then receives a lane-dense (T*B_pad, cols) slab.
        x_tm = jnp.transpose(x, (1, 0, 2))                     # (T, B, F)
        x_tm = jnp.pad(x_tm, ((0, 0), (0, B_pad - B), (0, 0)))
        x2d = x_tm.reshape(T * B_pad, F).astype(jnp.bfloat16)
        xproj = jnp.dot(x2d, w_ih0_T,
                        preferred_element_type=jnp.float32) + b0
        xproj = jnp.pad(xproj, ((0, 0), (0, cols - G)))
        # Single combined HBM buffer -> one HBM->VMEM DMA.
        buf = jnp.concatenate([p_buf, xproj.astype(jnp.bfloat16)], axis=0)

        kernel = make_airquality_kernel(
            B_pad=B_pad, T=T, H=H, n_lstm=n_lstm, dense_in=dense_in,
            layout=layout, cols=cols, xproj_off=p_rows)

        out = pl.pallas_call(
            kernel,
            out_shape=jax.ShapeDtypeStruct((B_pad, cols), jnp.float32),
            in_specs=[pl.BlockSpec(memory_space=pltpu.MemorySpace.VMEM)],
            out_specs=pl.BlockSpec(memory_space=pltpu.MemorySpace.VMEM),
        )(buf)
        return out[:B, :out_size]

    return lambda x: forward(x, p_buf, w_ih0_T, b0)


# ----------------------------------------------------------------------------
# Parameter init + pure-JAX reference (mirrors the PyTorch module, inference)
# ----------------------------------------------------------------------------
def init_params(key, input_size, lstm_size, n_lstm_layers,
                dense_layers, output_size):
    params = {"lstm": [], "dense": []}
    k = 1.0 / jnp.sqrt(lstm_size)

    in_dim = input_size
    for _ in range(n_lstm_layers):
        key, k1, k2, k3, k4 = jax.random.split(key, 5)
        w_ih = jax.random.uniform(k1, (4 * lstm_size, in_dim), jnp.float32, -k, k)
        w_hh = jax.random.uniform(k2, (4 * lstm_size, lstm_size), jnp.float32, -k, k)
        b_ih = jax.random.uniform(k3, (4 * lstm_size,), jnp.float32, -k, k)
        b_hh = jax.random.uniform(k4, (4 * lstm_size,), jnp.float32, -k, k)
        params["lstm"].append((w_ih, w_hh, b_ih, b_hh))
        in_dim = lstm_size

    dims = [lstm_size] + list(dense_layers) + [output_size]
    for i in range(len(dims) - 1):
        key, k1, k2 = jax.random.split(key, 3)
        bound = 1.0 / jnp.sqrt(dims[i])
        w = jax.random.uniform(k1, (dims[i + 1], dims[i]), jnp.float32,
                               -bound, bound)
        b = jax.random.uniform(k2, (dims[i + 1],), jnp.float32, -bound, bound)
        params["dense"].append((w, b))
    return params


def reference_forward(x, params, lstm_size):
    B, T, _ = x.shape
    H = lstm_size
    n_layers = len(params["lstm"])
    h = [jnp.zeros((B, H), jnp.float32) for _ in range(n_layers)]
    c = [jnp.zeros((B, H), jnp.float32) for _ in range(n_layers)]
    for t in range(T):
        inp = x[:, t, :]
        for l, (w_ih, w_hh, b_ih, b_hh) in enumerate(params["lstm"]):
            gates = inp @ w_ih.T + h[l] @ w_hh.T + b_ih + b_hh
            i_g = jax.nn.sigmoid(gates[:, 0 * H:1 * H])
            f_g = jax.nn.sigmoid(gates[:, 1 * H:2 * H])
            g_g = jnp.tanh(gates[:, 2 * H:3 * H])
            o_g = jax.nn.sigmoid(gates[:, 3 * H:4 * H])
            c[l] = f_g * c[l] + i_g * g_g
            h[l] = o_g * jnp.tanh(c[l])
            inp = h[l]
    feat = h[-1]
    for (w, b) in params["dense"]:
        feat = jnp.maximum(feat, 0.0) @ w.T + b
    return feat


if __name__ == "__main__":
    # Small config consistent with the module's constructor.
    input_size = 4
    output_size = 1
    lstm_size = 32
    n_lstm_layers = 2
    dense_layers = [16]
    batch = 2
    seq = 8

    key = jax.random.PRNGKey(0)
    key, kx, kp = jax.random.split(key, 3)
    x = jax.random.normal(kx, (batch, seq, input_size), jnp.float32)
    params = init_params(kp, input_size, lstm_size, n_lstm_layers,
                         dense_layers, output_size)

    forward = build_forward(params, lstm_size)      # packs params once
    out = jax.block_until_ready(forward(x))

    ref = reference_forward(x, params, lstm_size)
    assert out.shape == (batch, output_size), out.shape
    # bf16 matmul operands -> relaxed tolerance (~1e-2 relative expected).
    assert jnp.allclose(out, ref, atol=5e-2, rtol=5e-2), (out, ref)

    print("KERNEL_OK")
</pallas_src>

<mosaic_0001>
module attributes {stable_mosaic.version = 11 : i64} {
  func.func @kernel(%arg0: memref<368x128xbf16, #tpu.memory_space<vmem>>, %arg1: memref<8x128xf32, #tpu.memory_space<vmem>>) attributes {dimension_semantics = [], scalar_prefetch = 0 : i64, scratch_operands = 0 : i64, tpu.core_type = #tpu.core_type<tc>} {
    %c0 = arith.constant 0 : index
    %c0_0 = arith.constant 0 : index
    %0 = vector.load %arg0[%c0, %c0_0] : memref<368x128xbf16, #tpu.memory_space<vmem>>, vector<32x128xbf16>
    %c32 = arith.constant 32 : index
    %c0_1 = arith.constant 0 : index
    %1 = vector.load %arg0[%c32, %c0_1] : memref<368x128xbf16, #tpu.memory_space<vmem>>, vector<32x128xbf16>
    %c64 = arith.constant 64 : index
    %c0_2 = arith.constant 0 : index
    %2 = vector.load %arg0[%c64, %c0_2] : memref<368x128xbf16, #tpu.memory_space<vmem>>, vector<32x128xbf16>
    %c96 = arith.constant 96 : index
    %c0_3 = arith.constant 0 : index
    %3 = vector.load %arg0[%c96, %c0_3] : memref<368x128xbf16, #tpu.memory_space<vmem>>, vector<1x128xbf16>
    %4 = arith.extf %3 : vector<1x128xbf16> to vector<1x128xf32>
    %5 = vector.shape_cast %4 : vector<1x128xf32> to vector<1x128xf32>
    %6 = vector.broadcast %5 : vector<1x128xf32> to vector<8x128xf32>
    %c112 = arith.constant 112 : index
    %c0_4 = arith.constant 0 : index
    %7 = vector.load %arg0[%c112, %c0_4] : memref<368x128xbf16, #tpu.memory_space<vmem>>, vector<32x128xbf16>
    %c160 = arith.constant 160 : index
    %c0_5 = arith.constant 0 : index
    %8 = vector.load %arg0[%c160, %c0_5] : memref<368x128xbf16, #tpu.memory_space<vmem>>, vector<128x128xbf16>
    %c144 = arith.constant 144 : index
    %c0_6 = arith.constant 0 : index
    %9 = vector.load %arg0[%c144, %c0_6] : memref<368x128xbf16, #tpu.memory_space<vmem>>, vector<1x128xbf16>
    %10 = arith.extf %9 : vector<1x128xbf16> to vector<1x128xf32>
    %11 = vector.shape_cast %10 : vector<1x128xf32> to vector<1x128xf32>
    %12 = vector.broadcast %11 : vector<1x128xf32> to vector<8x128xf32>
    %c288 = arith.constant 288 : index
    %c0_7 = arith.constant 0 : index
    %13 = vector.load %arg0[%c288, %c0_7] : memref<368x128xbf16, #tpu.memory_space<vmem>>, vector<1x128xbf16>
    %14 = arith.extf %13 : vector<1x128xbf16> to vector<1x128xf32>
    %15 = vector.shape_cast %14 : vector<1x128xf32> to vector<1x128xf32>
    %16 = vector.broadcast %15 : vector<1x128xf32> to vector<8x128xf32>
    %c304 = arith.constant 304 : index
    %c0_8 = arith.constant 0 : index
    %17 = vector.load %arg0[%c304, %c0_8] : memref<368x128xbf16, #tpu.memory_space<vmem>>, vector<64x128xbf16>
    %18 = arith.extf %17 : vector<64x128xbf16> to vector<64x128xf32>
    %cst = arith.constant 0.000000e+00 : f32
    %19 = vector.broadcast %cst : f32 to vector<8x32xf32>
    %cst_9 = arith.constant 0.000000e+00 : f32
    %20 = vector.broadcast %cst_9 : f32 to vector<8x32xf32>
    %cst_10 = arith.constant 0.000000e+00 : f32
    %21 = vector.broadcast %cst_10 : f32 to vector<8x32xf32>
    %cst_11 = arith.constant 0.000000e+00 : f32
    %22 = vector.broadcast %cst_11 : f32 to vector<8x32xf32>
    %23 = vector.extract_strided_slice %18 {offsets = [0, 0], sizes = [8, 128], strides = [1, 1]} : vector<64x128xf32> to vector<8x128xf32>
    %24 = arith.truncf %19 : vector<8x32xf32> to vector<8x32xbf16>
    %cst_12 = arith.constant dense<0.000000e+00> : vector<8x128xf32>
    %25 = tpu.matmul %24, %0, %cst_12 {dimension_numbers = #tpu.dot_dimension_numbers<[1], [0], [0], [1], [0, 0, 1, 1], [], []>} : vector<8x32xbf16>, vector<32x128xbf16>, vector<8x128xf32> -> vector<8x128xf32>
    %26 = arith.addf %23, %25 : vector<8x128xf32>
    %27 = arith.negf %26 : vector<8x128xf32>
    %28 = math.exp %27 : vector<8x128xf32>
    %cst_13 = arith.constant 1.000000e+00 : f32
    %29 = vector.broadcast %cst_13 : f32 to vector<8x128xf32>
    %30 = arith.addf %29, %28 : vector<8x128xf32>
    %31 = arith.divf %29, %30 : vector<8x128xf32>
    %32 = math.tanh %26 : vector<8x128xf32>
    %33 = vector.extract_strided_slice %31 {offsets = [0, 0], sizes = [8, 32], strides = [1, 1]} : vector<8x128xf32> to vector<8x32xf32>
    %34 = vector.extract_strided_slice %31 {offsets = [0, 32], sizes = [8, 32], strides = [1, 1]} : vector<8x128xf32> to vector<8x32xf32>
    %35 = vector.extract_strided_slice %32 {offsets = [0, 64], sizes = [8, 32], strides = [1, 1]} : vector<8x128xf32> to vector<8x32xf32>
    %36 = vector.extract_strided_slice %31 {offsets = [0, 96], sizes = [8, 32], strides = [1, 1]} : vector<8x128xf32> to vector<8x32xf32>
    %37 = arith.mulf %34, %21 : vector<8x32xf32>
    %38 = arith.mulf %33, %35 : vector<8x32xf32>
    %39 = arith.addf %37, %38 : vector<8x32xf32>
    %40 = math.tanh %39 : vector<8x32xf32>
    %41 = arith.mulf %36, %40 : vector<8x32xf32>
    %42 = arith.truncf %41 : vector<8x32xf32> to vector<8x32xbf16>
    %cst_14 = arith.constant dense<0.000000e+00> : vector<8x128xf32>
    %43 = tpu.matmul %42, %1, %cst_14 {dimension_numbers = #tpu.dot_dimension_numbers<[1], [0], [0], [1], [0, 0, 1, 1], [], []>} : vector<8x32xbf16>, vector<32x128xbf16>, vector<8x128xf32> -> vector<8x128xf32>
    %44 = arith.truncf %20 : vector<8x32xf32> to vector<8x32xbf16>
    %cst_15 = arith.constant dense<0.000000e+00> : vector<8x128xf32>
    %45 = tpu.matmul %44, %2, %cst_15 {dimension_numbers = #tpu.dot_dimension_numbers<[1], [0], [0], [1], [0, 0, 1, 1], [], []>} : vector<8x32xbf16>, vector<32x128xbf16>, vector<8x128xf32> -> vector<8x128xf32>
    %46 = arith.addf %43, %45 : vector<8x128xf32>
    %47 = arith.addf %46, %6 : vector<8x128xf32>
    %48 = arith.negf %47 : vector<8x128xf32>
    %49 = math.exp %48 : vector<8x128xf32>
    %cst_16 = arith.constant 1.000000e+00 : f32
    %50 = vector.broadcast %cst_16 : f32 to vector<8x128xf32>
    %51 = arith.addf %50, %49 : vector<8x128xf32>
    %52 = arith.divf %50, %51 : vector<8x128xf32>
    %53 = math.tanh %47 : vector<8x128xf32>
    %54 = vector.extract_strided_slice %52 {offsets = [0, 0], sizes = [8, 32], strides = [1, 1]} : vector<8x128xf32> to vector<8x32xf32>
    %55 = vector.extract_strided_slice %52 {offsets = [0, 32], sizes = [8, 32], strides = [1, 1]} : vector<8x128xf32> to vector<8x32xf32>
    %56 = vector.extract_strided_slice %53 {offsets = [0, 64], sizes = [8, 32], strides = [1, 1]} : vector<8x128xf32> to vector<8x32xf32>
    %57 = vector.extract_strided_slice %52 {offsets = [0, 96], sizes = [8, 32], strides = [1, 1]} : vector<8x128xf32> to vector<8x32xf32>
    %58 = arith.mulf %55, %22 : vector<8x32xf32>
    %59 = arith.mulf %54, %56 : vector<8x32xf32>
    %60 = arith.addf %58, %59 : vector<8x32xf32>
    %61 = math.tanh %60 : vector<8x32xf32>
    %62 = arith.mulf %57, %61 : vector<8x32xf32>
    %63 = vector.extract_strided_slice %18 {offsets = [8, 0], sizes = [8, 128], strides = [1, 1]} : vector<64x128xf32> to vector<8x128xf32>
    %64 = arith.truncf %41 : vector<8x32xf32> to vector<8x32xbf16>
    %cst_17 = arith.constant dense<0.000000e+00> : vector<8x128xf32>
    %65 = tpu.matmul %64, %0, %cst_17 {dimension_numbers = #tpu.dot_dimension_numbers<[1], [0], [0], [1], [0, 0, 1, 1], [], []>} : vector<8x32xbf16>, vector<32x128xbf16>, vector<8x128xf32> -> vector<8x128xf32>
    %66 = arith.addf %63, %65 : vector<8x128xf32>
    %67 = arith.negf %66 : vector<8x128xf32>
    %68 = math.exp %67 : vector<8x128xf32>
    %cst_18 = arith.constant 1.000000e+00 : f32
    %69 = vector.broadcast %cst_18 : f32 to vector<8x128xf32>
    %70 = arith.addf %69, %68 : vector<8x128xf32>
    %71 = arith.divf %69, %70 : vector<8x128xf32>
    %72 = math.tanh %66 : vector<8x128xf32>
    %73 = vector.extract_strided_slice %71 {offsets = [0, 0], sizes = [8, 32], strides = [1, 1]} : vector<8x128xf32> to vector<8x32xf32>
    %74 = vector.extract_strided_slice %71 {offsets = [0, 32], sizes = [8, 32], strides = [1, 1]} : vector<8x128xf32> to vector<8x32xf32>
    %75 = vector.extract_strided_slice %72 {offsets = [0, 64], sizes = [8, 32], strides = [1, 1]} : vector<8x128xf32> to vector<8x32xf32>
    %76 = vector.extract_strided_slice %71 {offsets = [0, 96], sizes = [8, 32], strides = [1, 1]} : vector<8x128xf32> to vector<8x32xf32>
    %77 = arith.mulf %74, %39 : vector<8x32xf32>
    %78 = arith.mulf %73, %75 : vector<8x32xf32>
    %79 = arith.addf %77, %78 : vector<8x32xf32>
    %80 = math.tanh %79 : vector<8x32xf32>
    %81 = arith.mulf %76, %80 : vector<8x32xf32>
    %82 = arith.truncf %81 : vector<8x32xf32> to vector<8x32xbf16>
    %cst_19 = arith.constant dense<0.000000e+00> : vector<8x128xf32>
    %83 = tpu.matmul %82, %1, %cst_19 {dimension_numbers = #tpu.dot_dimension_numbers<[1], [0], [0], [1], [0, 0, 1, 1], [], []>} : vector<8x32xbf16>, vector<32x128xbf16>, vector<8x128xf32> -> vector<8x128xf32>
    %84 = arith.truncf %62 : vector<8x32xf32> to vector<8x32xbf16>
    %cst_20 = arith.constant dense<0.000000e+00> : vector<8x128xf32>
    %85 = tpu.matmul %84, %2, %cst_20 {dimension_numbers = #tpu.dot_dimension_numbers<[1], [0], [0], [1], [0, 0, 1, 1], [], []>} : vector<8x32xbf16>, vector<32x128xbf16>, vector<8x128xf32> -> vector<8x128xf32>
    %86 = arith.addf %83, %85 : vector<8x128xf32>
    %87 = arith.addf %86, %6 : vector<8x128xf32>
    %88 = arith.negf %87 : vector<8x128xf32>
    %89 = math.exp %88 : vector<8x128xf32>
    %cst_21 = arith.constant 1.000000e+00 : f32
    %90 = vector.broadcast %cst_21 : f32 to vector<8x128xf32>
    %91 = arith.addf %90, %89 : vector<8x128xf32>
    %92 = arith.divf %90, %91 : vector<8x128xf32>
    %93 = math.tanh %87 : vector<8x128xf32>
    %94 = vector.extract_strided_slice %92 {offsets = [0, 0], sizes = [8, 32], strides = [1, 1]} : vector<8x128xf32> to vector<8x32xf32>
    %95 = vector.extract_strided_slice %92 {offsets = [0, 32], sizes = [8, 32], strides = [1, 1]} : vector<8x128xf32> to vector<8x32xf32>
    %96 = vector.extract_strided_slice %93 {offsets = [0, 64], sizes = [8, 32], strides = [1, 1]} : vector<8x128xf32> to vector<8x32xf32>
    %97 = vector.extract_strided_slice %92 {offsets = [0, 96], sizes = [8, 32], strides = [1, 1]} : vector<8x128xf32> to vector<8x32xf32>
    %98 = arith.mulf %95, %60 : vector<8x32xf32>
    %99 = arith.mulf %94, %96 : vector<8x32xf32>
    %100 = arith.addf %98, %99 : vector<8x32xf32>
    %101 = math.tanh %100 : vector<8x32xf32>
    %102 = arith.mulf %97, %101 : vector<8x32xf32>
    %103 = vector.extract_strided_slice %18 {offsets = [16, 0], sizes = [8, 128], strides = [1, 1]} : vector<64x128xf32> to vector<8x128xf32>
    %104 = arith.truncf %81 : vector<8x32xf32> to vector<8x32xbf16>
    %cst_22 = arith.constant dense<0.000000e+00> : vector<8x128xf32>
    %105 = tpu.matmul %104, %0, %cst_22 {dimension_numbers = #tpu.dot_dimension_numbers<[1], [0], [0], [1], [0, 0, 1, 1], [], []>} : vector<8x32xbf16>, vector<32x128xbf16>, vector<8x128xf32> -> vector<8x128xf32>
    %106 = arith.addf %103, %105 : vector<8x128xf32>
    %107 = arith.negf %106 : vector<8x128xf32>
    %108 = math.exp %107 : vector<8x128xf32>
    %cst_23 = arith.constant 1.000000e+00 : f32
    %109 = vector.broadcast %cst_23 : f32 to vector<8x128xf32>
    %110 = arith.addf %109, %108 : vector<8x128xf32>
    %111 = arith.divf %109, %110 : vector<8x128xf32>
    %112 = math.tanh %106 : vector<8x128xf32>
    %113 = vector.extract_strided_slice %111 {offsets = [0, 0], sizes = [8, 32], strides = [1, 1]} : vector<8x128xf32> to vector<8x32xf32>
    %114 = vector.extract_strided_slice %111 {offsets = [0, 32], sizes = [8, 32], strides = [1, 1]} : vector<8x128xf32> to vector<8x32xf32>
    %115 = vector.extract_strided_slice %112 {offsets = [0, 64], sizes = [8, 32], strides = [1, 1]} : vector<8x128xf32> to vector<8x32xf32>
    %116 = vector.extract_strided_slice %111 {offsets = [0, 96], sizes = [8, 32], strides = [1, 1]} : vector<8x128xf32> to vector<8x32xf32>
    %117 = arith.mulf %114, %79 : vector<8x32xf32>
    %118 = arith.mulf %113, %115 : vector<8x32xf32>
    %119 = arith.addf %117, %118 : vector<8x32xf32>
    %120 = math.tanh %119 : vector<8x32xf32>
    %121 = arith.mulf %116, %120 : vector<8x32xf32>
    %122 = arith.truncf %121 : vector<8x32xf32> to vector<8x32xbf16>
    %cst_24 = arith.constant dense<0.000000e+00> : vector<8x128xf32>
    %123 = tpu.matmul %122, %1, %cst_24 {dimension_numbers = #tpu.dot_dimension_numbers<[1], [0], [0], [1], [0, 0, 1, 1], [], []>} : vector<8x32xbf16>, vector<32x128xbf16>, vector<8x128xf32> -> vector<8x128xf32>
    %124 = arith.truncf %102 : vector<8x32xf32> to vector<8x32xbf16>
    %cst_25 = arith.constant dense<0.000000e+00> : vector<8x128xf32>
    %125 = tpu.matmul %124, %2, %cst_25 {dimension_numbers = #tpu.dot_dimension_numbers<[1], [0], [0], [1], [0, 0, 1, 1], [], []>} : vector<8x32xbf16>, vector<32x128xbf16>, vector<8x128xf32> -> vector<8x128xf32>
    %126 = arith.addf %123, %125 : vector<8x128xf32>
    %127 = arith.addf %126, %6 : vector<8x128xf32>
    %128 = arith.negf %127 : vector<8x128xf32>
    %129 = math.exp %128 : vector<8x128xf32>
    %cst_26 = arith.constant 1.000000e+00 : f32
    %130 = vector.broadcast %cst_26 : f32 to vector<8x128xf32>
    %131 = arith.addf %130, %129 : vector<8x128xf32>
    %132 = arith.divf %130, %131 : vector<8x128xf32>
    %133 = math.tanh %127 : vector<8x128xf32>
    %134 = vector.extract_strided_slice %132 {offsets = [0, 0], sizes = [8, 32], strides = [1, 1]} : vector<8x128xf32> to vector<8x32xf32>
    %135 = vector.extract_strided_slice %132 {offsets = [0, 32], sizes = [8, 32], strides = [1, 1]} : vector<8x128xf32> to vector<8x32xf32>
    %136 = vector.extract_strided_slice %133 {offsets = [0, 64], sizes = [8, 32], strides = [1, 1]} : vector<8x128xf32> to vector<8x32xf32>
    %137 = vector.extract_strided_slice %132 {offsets = [0, 96], sizes = [8, 32], strides = [1, 1]} : vector<8x128xf32> to vector<8x32xf32>
    %138 = arith.mulf %135, %100 : vector<8x32xf32>
    %139 = arith.mulf %134, %136 : vector<8x32xf32>
    %140 = arith.addf %138, %139 : vector<8x32xf32>
    %141 = math.tanh %140 : vector<8x32xf32>
    %142 = arith.mulf %137, %141 : vector<8x32xf32>
    %143 = vector.extract_strided_slice %18 {offsets = [24, 0], sizes = [8, 128], strides = [1, 1]} : vector<64x128xf32> to vector<8x128xf32>
    %144 = arith.truncf %121 : vector<8x32xf32> to vector<8x32xbf16>
    %cst_27 = arith.constant dense<0.000000e+00> : vector<8x128xf32>
    %145 = tpu.matmul %144, %0, %cst_27 {dimension_numbers = #tpu.dot_dimension_numbers<[1], [0], [0], [1], [0, 0, 1, 1], [], []>} : vector<8x32xbf16>, vector<32x128xbf16>, vector<8x128xf32> -> vector<8x128xf32>
    %146 = arith.addf %143, %145 : vector<8x128xf32>
    %147 = arith.negf %146 : vector<8x128xf32>
    %148 = math.exp %147 : vector<8x128xf32>
    %cst_28 = arith.constant 1.000000e+00 : f32
    %149 = vector.broadcast %cst_28 : f32 to vector<8x128xf32>
    %150 = arith.addf %149, %148 : vector<8x128xf32>
    %151 = arith.divf %149, %150 : vector<8x128xf32>
    %152 = math.tanh %146 : vector<8x128xf32>
    %153 = vector.extract_strided_slice %151 {offsets = [0, 0], sizes = [8, 32], strides = [1, 1]} : vector<8x128xf32> to vector<8x32xf32>
    %154 = vector.extract_strided_slice %151 {offsets = [0, 32], sizes = [8, 32], strides = [1, 1]} : vector<8x128xf32> to vector<8x32xf32>
    %155 = vector.extract_strided_slice %152 {offsets = [0, 64], sizes = [8, 32], strides = [1, 1]} : vector<8x128xf32> to vector<8x32xf32>
    %156 = vector.extract_strided_slice %151 {offsets = [0, 96], sizes = [8, 32], strides = [1, 1]} : vector<8x128xf32> to vector<8x32xf32>
    %157 = arith.mulf %154, %119 : vector<8x32xf32>
    %158 = arith.mulf %153, %155 : vector<8x32xf32>
    %159 = arith.addf %157, %158 : vector<8x32xf32>
    %160 = math.tanh %159 : vector<8x32xf32>
    %161 = arith.mulf %156, %160 : vector<8x32xf32>
    %162 = arith.truncf %161 : vector<8x32xf32> to vector<8x32xbf16>
    %cst_29 = arith.constant dense<0.000000e+00> : vector<8x128xf32>
    %163 = tpu.matmul %162, %1, %cst_29 {dimension_numbers = #tpu.dot_dimension_numbers<[1], [0], [0], [1], [0, 0, 1, 1], [], []>} : vector<8x32xbf16>, vector<32x128xbf16>, vector<8x128xf32> -> vector<8x128xf32>
    %164 = arith.truncf %142 : vector<8x32xf32> to vector<8x32xbf16>
    %cst_30 = arith.constant dense<0.000000e+00> : vector<8x128xf32>
    %165 = tpu.matmul %164, %2, %cst_30 {dimension_numbers = #tpu.dot_dimension_numbers<[1], [0], [0], [1], [0, 0, 1, 1], [], []>} : vector<8x32xbf16>, vector<32x128xbf16>, vector<8x128xf32> -> vector<8x128xf32>
    %166 = arith.addf %163, %165 : vector<8x128xf32>
    %167 = arith.addf %166, %6 : vector<8x128xf32>
    %168 = arith.negf %167 : vector<8x128xf32>
    %169 = math.exp %168 : vector<8x128xf32>
    %cst_31 = arith.constant 1.000000e+00 : f32
    %170 = vector.broadcast %cst_31 : f32 to vector<8x128xf32>
    %171 = arith.addf %170, %169 : vector<8x128xf32>
    %172 = arith.divf %170, %171 : vector<8x128xf32>
    %173 = math.tanh %167 : vector<8x128xf32>
    %174 = vector.extract_strided_slice %172 {offsets = [0, 0], sizes = [8, 32], strides = [1, 1]} : vector<8x128xf32> to vector<8x32xf32>
    %175 = vector.extract_strided_slice %172 {offsets = [0, 32], sizes = [8, 32], strides = [1, 1]} : vector<8x128xf32> to vector<8x32xf32>
    %176 = vector.extract_strided_slice %173 {offsets = [0, 64], sizes = [8, 32], strides = [1, 1]} : vector<8x128xf32> to vector<8x32xf32>
    %177 = vector.extract_strided_slice %172 {offsets = [0, 96], sizes = [8, 32], strides = [1, 1]} : vector<8x128xf32> to vector<8x32xf32>
    %178 = arith.mulf %175, %140 : vector<8x32xf32>
    %179 = arith.mulf %174, %176 : vector<8x32xf32>
    %180 = arith.addf %178, %179 : vector<8x32xf32>
    %181 = math.tanh %180 : vector<8x32xf32>
    %182 = arith.mulf %177, %181 : vector<8x32xf32>
    %183 = vector.extract_strided_slice %18 {offsets = [32, 0], sizes = [8, 128], strides = [1, 1]} : vector<64x128xf32> to vector<8x128xf32>
    %184 = arith.truncf %161 : vector<8x32xf32> to vector<8x32xbf16>
    %cst_32 = arith.constant dense<0.000000e+00> : vector<8x128xf32>
    %185 = tpu.matmul %184, %0, %cst_32 {dimension_numbers = #tpu.dot_dimension_numbers<[1], [0], [0], [1], [0, 0, 1, 1], [], []>} : vector<8x32xbf16>, vector<32x128xbf16>, vector<8x128xf32> -> vector<8x128xf32>
    %186 = arith.addf %183, %185 : vector<8x128xf32>
    %187 = arith.negf %186 : vector<8x128xf32>
    %188 = math.exp %187 : vector<8x128xf32>
    %cst_33 = arith.constant 1.000000e+00 : f32
    %189 = vector.broadcast %cst_33 : f32 to vector<8x128xf32>
    %190 = arith.addf %189, %188 : vector<8x128xf32>
    %191 = arith.divf %189, %190 : vector<8x128xf32>
    %192 = math.tanh %186 : vector<8x128xf32>
    %193 = vector.extract_strided_slice %191 {offsets = [0, 0], sizes = [8, 32], strides = [1, 1]} : vector<8x128xf32> to vector<8x32xf32>
    %194 = vector.extract_strided_slice %191 {offsets = [0, 32], sizes = [8, 32], strides = [1, 1]} : vector<8x128xf32> to vector<8x32xf32>
    %195 = vector.extract_strided_slice %192 {offsets = [0, 64], sizes = [8, 32], strides = [1, 1]} : vector<8x128xf32> to vector<8x32xf32>
    %196 = vector.extract_strided_slice %191 {offsets = [0, 96], sizes = [8, 32], strides = [1, 1]} : vector<8x128xf32> to vector<8x32xf32>
    %197 = arith.mulf %194, %159 : vector<8x32xf32>
    %198 = arith.mulf %193, %195 : vector<8x32xf32>
    %199 = arith.addf %197, %198 : vector<8x32xf32>
    %200 = math.tanh %199 : vector<8x32xf32>
    %201 = arith.mulf %196, %200 : vector<8x32xf32>
    %202 = arith.truncf %201 : vector<8x32xf32> to vector<8x32xbf16>
    %cst_34 = arith.constant dense<0.000000e+00> : vector<8x128xf32>
    %203 = tpu.matmul %202, %1, %cst_34 {dimension_numbers = #tpu.dot_dimension_numbers<[1], [0], [0], [1], [0, 0, 1, 1], [], []>} : vector<8x32xbf16>, vector<32x128xbf16>, vector<8x128xf32> -> vector<8x128xf32>
    %204 = arith.truncf %182 : vector<8x32xf32> to vector<8x32xbf16>
    %cst_35 = arith.constant dense<0.000000e+00> : vector<8x128xf32>
    %205 = tpu.matmul %204, %2, %cst_35 {dimension_numbers = #tpu.dot_dimension_numbers<[1], [0], [0], [1], [0, 0, 1, 1], [], []>} : vector<8x32xbf16>, vector<32x128xbf16>, vector<8x128xf32> -> vector<8x128xf32>
    %206 = arith.addf %203, %205 : vector<8x128xf32>
    %207 = arith.addf %206, %6 : vector<8x128xf32>
    %208 = arith.negf %207 : vector<8x128xf32>
    %209 = math.exp %208 : vector<8x128xf32>
    %cst_36 = arith.constant 1.000000e+00 : f32
    %210 = vector.broadcast %cst_36 : f32 to vector<8x128xf32>
    %211 = arith.addf %210, %209 : vector<8x128xf32>
    %212 = arith.divf %210, %211 : vector<8x128xf32>
    %213 = math.tanh %207 : vector<8x128xf32>
    %214 = vector.extract_strided_slice %212 {offsets = [0, 0], sizes = [8, 32], strides = [1, 1]} : vector<8x128xf32> to vector<8x32xf32>
    %215 = vector.extract_strided_slice %212 {offsets = [0, 32], sizes = [8, 32], strides = [1, 1]} : vector<8x128xf32> to vector<8x32xf32>
    %216 = vector.extract_strided_slice %213 {offsets = [0, 64], sizes = [8, 32], strides = [1, 1]} : vector<8x128xf32> to vector<8x32xf32>
    %217 = vector.extract_strided_slice %212 {offsets = [0, 96], sizes = [8, 32], strides = [1, 1]} : vector<8x128xf32> to vector<8x32xf32>
    %218 = arith.mulf %215, %180 : vector<8x32xf32>
    %219 = arith.mulf %214, %216 : vector<8x32xf32>
    %220 = arith.addf %218, %219 : vector<8x32xf32>
    %221 = math.tanh %220 : vector<8x32xf32>
    %222 = arith.mulf %217, %221 : vector<8x32xf32>
    %223 = vector.extract_strided_slice %18 {offsets = [40, 0], sizes = [8, 128], strides = [1, 1]} : vector<64x128xf32> to vector<8x128xf32>
    %224 = arith.truncf %201 : vector<8x32xf32> to vector<8x32xbf16>
    %cst_37 = arith.constant dense<0.000000e+00> : vector<8x128xf32>
    %225 = tpu.matmul %224, %0, %cst_37 {dimension_numbers = #tpu.dot_dimension_numbers<[1], [0], [0], [1], [0, 0, 1, 1], [], []>} : vector<8x32xbf16>, vector<32x128xbf16>, vector<8x128xf32> -> vector<8x128xf32>
    %226 = arith.addf %223, %225 : vector<8x128xf32>
    %227 = arith.negf %226 : vector<8x128xf32>
    %228 = math.exp %227 : vector<8x128xf32>
    %cst_38 = arith.constant 1.000000e+00 : f32
    %229 = vector.broadcast %cst_38 : f32 to vector<8x128xf32>
    %230 = arith.addf %229, %228 : vector<8x128xf32>
    %231 = arith.divf %229, %230 : vector<8x128xf32>
    %232 = math.tanh %226 : vector<8x128xf32>
    %233 = vector.extract_strided_slice %231 {offsets = [0, 0], sizes = [8, 32], strides = [1, 1]} : vector<8x128xf32> to vector<8x32xf32>
    %234 = vector.extract_strided_slice %231 {offsets = [0, 32], sizes = [8, 32], strides = [1, 1]} : vector<8x128xf32> to vector<8x32xf32>
    %235 = vector.extract_strided_slice %232 {offsets = [0, 64], sizes = [8, 32], strides = [1, 1]} : vector<8x128xf32> to vector<8x32xf32>
    %236 = vector.extract_strided_slice %231 {offsets = [0, 96], sizes = [8, 32], strides = [1, 1]} : vector<8x128xf32> to vector<8x32xf32>
    %237 = arith.mulf %234, %199 : vector<8x32xf32>
    %238 = arith.mulf %233, %235 : vector<8x32xf32>
    %239 = arith.addf %237, %238 : vector<8x32xf32>
    %240 = math.tanh %239 : vector<8x32xf32>
    %241 = arith.mulf %236, %240 : vector<8x32xf32>
    %242 = arith.truncf %241 : vector<8x32xf32> to vector<8x32xbf16>
    %cst_39 = arith.constant dense<0.000000e+00> : vector<8x128xf32>
    %243 = tpu.matmul %242, %1, %cst_39 {dimension_numbers = #tpu.dot_dimension_numbers<[1], [0], [0], [1], [0, 0, 1, 1], [], []>} : vector<8x32xbf16>, vector<32x128xbf16>, vector<8x128xf32> -> vector<8x128xf32>
    %244 = arith.truncf %222 : vector<8x32xf32> to vector<8x32xbf16>
    %cst_40 = arith.constant dense<0.000000e+00> : vector<8x128xf32>
    %245 = tpu.matmul %244, %2, %cst_40 {dimension_numbers = #tpu.dot_dimension_numbers<[1], [0], [0], [1], [0, 0, 1, 1], [], []>} : vector<8x32xbf16>, vector<32x128xbf16>, vector<8x128xf32> -> vector<8x128xf32>
    %246 = arith.addf %243, %245 : vector<8x128xf32>
    %247 = arith.addf %246, %6 : vector<8x128xf32>
    %248 = arith.negf %247 : vector<8x128xf32>
    %249 = math.exp %248 : vector<8x128xf32>
    %cst_41 = arith.constant 1.000000e+00 : f32
    %250 = vector.broadcast %cst_41 : f32 to vector<8x128xf32>
    %251 = arith.addf %250, %249 : vector<8x128xf32>
    %252 = arith.divf %250, %251 : vector<8x128xf32>
    %253 = math.tanh %247 : vector<8x128xf32>
    %254 = vector.extract_strided_slice %252 {offsets = [0, 0], sizes = [8, 32], strides = [1, 1]} : vector<8x128xf32> to vector<8x32xf32>
    %255 = vector.extract_strided_slice %252 {offsets = [0, 32], sizes = [8, 32], strides = [1, 1]} : vector<8x128xf32> to vector<8x32xf32>
    %256 = vector.extract_strided_slice %253 {offsets = [0, 64], sizes = [8, 32], strides = [1, 1]} : vector<8x128xf32> to vector<8x32xf32>
    %257 = vector.extract_strided_slice %252 {offsets = [0, 96], sizes = [8, 32], strides = [1, 1]} : vector<8x128xf32> to vector<8x32xf32>
    %258 = arith.mulf %255, %220 : vector<8x32xf32>
    %259 = arith.mulf %254, %256 : vector<8x32xf32>
    %260 = arith.addf %258, %259 : vector<8x32xf32>
    %261 = math.tanh %260 : vector<8x32xf32>
    %262 = arith.mulf %257, %261 : vector<8x32xf32>
    %263 = vector.extract_strided_slice %18 {offsets = [48, 0], sizes = [8, 128], strides = [1, 1]} : vector<64x128xf32> to vector<8x128xf32>
    %264 = arith.truncf %241 : vector<8x32xf32> to vector<8x32xbf16>
    %cst_42 = arith.constant dense<0.000000e+00> : vector<8x128xf32>
    %265 = tpu.matmul %264, %0, %cst_42 {dimension_numbers = #tpu.dot_dimension_numbers<[1], [0], [0], [1], [0, 0, 1, 1], [], []>} : vector<8x32xbf16>, vector<32x128xbf16>, vector<8x128xf32> -> vector<8x128xf32>
    %266 = arith.addf %263, %265 : vector<8x128xf32>
    %267 = arith.negf %266 : vector<8x128xf32>
    %268 = math.exp %267 : vector<8x128xf32>
    %cst_43 = arith.constant 1.000000e+00 : f32
    %269 = vector.broadcast %cst_43 : f32 to vector<8x128xf32>
    %270 = arith.addf %269, %268 : vector<8x128xf32>
    %271 = arith.divf %269, %270 : vector<8x128xf32>
    %272 = math.tanh %266 : vector<8x128xf32>
    %273 = vector.extract_strided_slice %271 {offsets = [0, 0], sizes = [8, 32], strides = [1, 1]} : vector<8x128xf32> to vector<8x32xf32>
    %274 = vector.extract_strided_slice %271 {offsets = [0, 32], sizes = [8, 32], strides = [1, 1]} : vector<8x128xf32> to vector<8x32xf32>
    %275 = vector.extract_strided_slice %272 {offsets = [0, 64], sizes = [8, 32], strides = [1, 1]} : vector<8x128xf32> to vector<8x32xf32>
    %276 = vector.extract_strided_slice %271 {offsets = [0, 96], sizes = [8, 32], strides = [1, 1]} : vector<8x128xf32> to vector<8x32xf32>
    %277 = arith.mulf %274, %239 : vector<8x32xf32>
    %278 = arith.mulf %273, %275 : vector<8x32xf32>
    %279 = arith.addf %277, %278 : vector<8x32xf32>
    %280 = math.tanh %279 : vector<8x32xf32>
    %281 = arith.mulf %276, %280 : vector<8x32xf32>
    %282 = arith.truncf %281 : vector<8x32xf32> to vector<8x32xbf16>
    %cst_44 = arith.constant dense<0.000000e+00> : vector<8x128xf32>
    %283 = tpu.matmul %282, %1, %cst_44 {dimension_numbers = #tpu.dot_dimension_numbers<[1], [0], [0], [1], [0, 0, 1, 1], [], []>} : vector<8x32xbf16>, vector<32x128xbf16>, vector<8x128xf32> -> vector<8x128xf32>
    %284 = arith.truncf %262 : vector<8x32xf32> to vector<8x32xbf16>
    %cst_45 = arith.constant dense<0.000000e+00> : vector<8x128xf32>
    %285 = tpu.matmul %284, %2, %cst_45 {dimension_numbers = #tpu.dot_dimension_numbers<[1], [0], [0], [1], [0, 0, 1, 1], [], []>} : vector<8x32xbf16>, vector<32x128xbf16>, vector<8x128xf32> -> vector<8x128xf32>
    %286 = arith.addf %283, %285 : vector<8x128xf32>
    %287 = arith.addf %286, %6 : vector<8x128xf32>
    %288 = arith.negf %287 : vector<8x128xf32>
    %289 = math.exp %288 : vector<8x128xf32>
    %cst_46 = arith.constant 1.000000e+00 : f32
    %290 = vector.broadcast %cst_46 : f32 to vector<8x128xf32>
    %291 = arith.addf %290, %289 : vector<8x128xf32>
    %292 = arith.divf %290, %291 : vector<8x128xf32>
    %293 = math.tanh %287 : vector<8x128xf32>
    %294 = vector.extract_strided_slice %292 {offsets = [0, 0], sizes = [8, 32], strides = [1, 1]} : vector<8x128xf32> to vector<8x32xf32>
    %295 = vector.extract_strided_slice %292 {offsets = [0, 32], sizes = [8, 32], strides = [1, 1]} : vector<8x128xf32> to vector<8x32xf32>
    %296 = vector.extract_strided_slice %293 {offsets = [0, 64], sizes = [8, 32], strides = [1, 1]} : vector<8x128xf32> to vector<8x32xf32>
    %297 = vector.extract_strided_slice %292 {offsets = [0, 96], sizes = [8, 32], strides = [1, 1]} : vector<8x128xf32> to vector<8x32xf32>
    %298 = arith.mulf %295, %260 : vector<8x32xf32>
    %299 = arith.mulf %294, %296 : vector<8x32xf32>
    %300 = arith.addf %298, %299 : vector<8x32xf32>
    %301 = math.tanh %300 : vector<8x32xf32>
    %302 = arith.mulf %297, %301 : vector<8x32xf32>
    %303 = vector.extract_strided_slice %18 {offsets = [56, 0], sizes = [8, 128], strides = [1, 1]} : vector<64x128xf32> to vector<8x128xf32>
    %304 = arith.truncf %281 : vector<8x32xf32> to vector<8x32xbf16>
    %cst_47 = arith.constant dense<0.000000e+00> : vector<8x128xf32>
    %305 = tpu.matmul %304, %0, %cst_47 {dimension_numbers = #tpu.dot_dimension_numbers<[1], [0], [0], [1], [0, 0, 1, 1], [], []>} : vector<8x32xbf16>, vector<32x128xbf16>, vector<8x128xf32> -> vector<8x128xf32>
    %306 = arith.addf %303, %305 : vector<8x128xf32>
    %307 = arith.negf %306 : vector<8x128xf32>
    %308 = math.exp %307 : vector<8x128xf32>
    %cst_48 = arith.constant 1.000000e+00 : f32
    %309 = vector.broadcast %cst_48 : f32 to vector<8x128xf32>
    %310 = arith.addf %309, %308 : vector<8x128xf32>
    %311 = arith.divf %309, %310 : vector<8x128xf32>
    %312 = math.tanh %306 : vector<8x128xf32>
    %313 = vector.extract_strided_slice %311 {offsets = [0, 0], sizes = [8, 32], strides = [1, 1]} : vector<8x128xf32> to vector<8x32xf32>
    %314 = vector.extract_strided_slice %311 {offsets = [0, 32], sizes = [8, 32], strides = [1, 1]} : vector<8x128xf32> to vector<8x32xf32>
    %315 = vector.extract_strided_slice %312 {offsets = [0, 64], sizes = [8, 32], strides = [1, 1]} : vector<8x128xf32> to vector<8x32xf32>
    %316 = vector.extract_strided_slice %311 {offsets = [0, 96], sizes = [8, 32], strides = [1, 1]} : vector<8x128xf32> to vector<8x32xf32>
    %317 = arith.mulf %314, %279 : vector<8x32xf32>
    %318 = arith.mulf %313, %315 : vector<8x32xf32>
    %319 = arith.addf %317, %318 : vector<8x32xf32>
    %320 = math.tanh %319 : vector<8x32xf32>
    %321 = arith.mulf %316, %320 : vector<8x32xf32>
    %322 = arith.truncf %321 : vector<8x32xf32> to vector<8x32xbf16>
    %cst_49 = arith.constant dense<0.000000e+00> : vector<8x128xf32>
    %323 = tpu.matmul %322, %1, %cst_49 {dimension_numbers = #tpu.dot_dimension_numbers<[1], [0], [0], [1], [0, 0, 1, 1], [], []>} : vector<8x32xbf16>, vector<32x128xbf16>, vector<8x128xf32> -> vector<8x128xf32>
    %324 = arith.truncf %302 : vector<8x32xf32> to vector<8x32xbf16>
    %cst_50 = arith.constant dense<0.000000e+00> : vector<8x128xf32>
    %325 = tpu.matmul %324, %2, %cst_50 {dimension_numbers = #tpu.dot_dimension_numbers<[1], [0], [0], [1], [0, 0, 1, 1], [], []>} : vector<8x32xbf16>, vector<32x128xbf16>, vector<8x128xf32> -> vector<8x128xf32>
    %326 = arith.addf %323, %325 : vector<8x128xf32>
    %327 = arith.addf %326, %6 : vector<8x128xf32>
    %328 = arith.negf %327 : vector<8x128xf32>
    %329 = math.exp %328 : vector<8x128xf32>
    %cst_51 = arith.constant 1.000000e+00 : f32
    %330 = vector.broadcast %cst_51 : f32 to vector<8x128xf32>
    %331 = arith.addf %330, %329 : vector<8x128xf32>
    %332 = arith.divf %330, %331 : vector<8x128xf32>
    %333 = math.tanh %327 : vector<8x128xf32>
    %334 = vector.extract_strided_slice %332 {offsets = [0, 0], sizes = [8, 32], strides = [1, 1]} : vector<8x128xf32> to vector<8x32xf32>
    %335 = vector.extract_strided_slice %332 {offsets = [0, 32], sizes = [8, 32], strides = [1, 1]} : vector<8x128xf32> to vector<8x32xf32>
    %336 = vector.extract_strided_slice %333 {offsets = [0, 64], sizes = [8, 32], strides = [1, 1]} : vector<8x128xf32> to vector<8x32xf32>
    %337 = vector.extract_strided_slice %332 {offsets = [0, 96], sizes = [8, 32], strides = [1, 1]} : vector<8x128xf32> to vector<8x32xf32>
    %338 = arith.mulf %335, %300 : vector<8x32xf32>
    %339 = arith.mulf %334, %336 : vector<8x32xf32>
    %340 = arith.addf %338, %339 : vector<8x32xf32>
    %341 = math.tanh %340 : vector<8x32xf32>
    %342 = arith.mulf %337, %341 : vector<8x32xf32>
    %cst_52 = arith.constant 0.000000e+00 : f32
    %343 = vector.broadcast %cst_52 : f32 to vector<8x32xf32>
    %344 = arith.maximumf %342, %343 : vector<8x32xf32>
    %345 = arith.truncf %344 : vector<8x32xf32> to vector<8x32xbf16>
    %cst_53 = arith.constant dense<0.000000e+00> : vector<8x128xf32>
    %346 = tpu.matmul %345, %7, %cst_53 {dimension_numbers = #tpu.dot_dimension_numbers<[1], [0], [0], [1], [0, 0, 1, 1], [], []>} : vector<8x32xbf16>, vector<32x128xbf16>, vector<8x128xf32> -> vector<8x128xf32>
    %347 = arith.addf %346, %12 : vector<8x128xf32>
    %cst_54 = arith.constant 0.000000e+00 : f32
    %348 = vector.broadcast %cst_54 : f32 to vector<8x128xf32>
    %349 = arith.maximumf %347, %348 : vector<8x128xf32>
    %350 = arith.truncf %349 : vector<8x128xf32> to vector<8x128xbf16>
    %cst_55 = arith.constant dense<0.000000e+00> : vector<8x128xf32>
    %351 = tpu.matmul %350, %8, %cst_55 {dimension_numbers = #tpu.dot_dimension_numbers<[1], [0], [0], [1], [0, 0, 1, 1], [], []>} : vector<8x128xbf16>, vector<128x128xbf16>, vector<8x128xf32> -> vector<8x128xf32>
    %352 = arith.addf %351, %16 : vector<8x128xf32>
    %c0_56 = arith.constant 0 : index
    %c0_57 = arith.constant 0 : index
    %353 = vector.load %arg1[%c0_56, %c0_57] : memref<8x128xf32, #tpu.memory_space<vmem>>, vector<8x128xf32>
    tpu.vector_store %arg1[%c0_56, %c0_57], %352 {strides = array<i32>} : memref<8x128xf32, #tpu.memory_space<vmem>>, vector<8x128xf32>,
    return
  }
}

</mosaic_0001>

<llo_original>
// kernel: forward.1
$region0: #{forward.1}
  #allocation0 [shape = 'u32[]', space=smem, size = 0x4, offset = 0x4, fixed_abs, tag = 'smem constant byte address 0x4 - core index']
  #allocation1 [shape = 'u32[144,128]{1,0:T(1,128)}', space=vmem, size = 0x12000, scoped, tag = 'internal scratch']
  %s0 = inlined_call_operand.vmem [shape: bf16[368,128], index: 0, kind: input, shape index: {}]
  %s1 = inlined_call_operand.vmem [shape: f32[8,128], index: 1, kind: output, shape index: {}]
  %s2 = sld [smem:[#allocation0]]
  $region14: #{forward.1} parent=0
    _
  %s4 = ssub.s32 1, %s2
  %s5 = scalar_select 0, %s4, %s2
  // Predicated region
  $region2: #{forward.1} parent=0 // pred_check
    _
  $region3: #{forward.1} parent=0 // pred_check_branch
    %7 = sbr.rel (0) target = $region5
  $region4: #{forward.1} parent=0 // pred_region
    _
  $region5: #{forward.1} parent=0 // pred_fallthru
    _
  %v9 = vld [vmem:[%s0] sm:$0xf]
  %v10 = vld [vmem:[%s0 + $0x4] sm:$0xf]
  %v11 = vld [vmem:[%s0 + $0x8] sm:$0xf]
  %v12 = vld [vmem:[%s0 + $0xc] sm:$0xf]
  %v13 = vld [vmem:[%s0 + $0x10] sm:$0xf]
  %v14 = vld [vmem:[%s0 + $0x14] sm:$0xf]
  %v15 = vld [vmem:[%s0 + $0x18] sm:$0xf]
  %v16 = vld [vmem:[%s0 + $0x1c] sm:$0xf]
  %v17 = vld [vmem:[%s0 + $0x20] sm:$0xf]
  %v18 = vld [vmem:[%s0 + $0x24] sm:$0xf]
  %v19 = vld [vmem:[%s0 + $0x28] sm:$0xf]
  %v20 = vld [vmem:[%s0 + $0x2c] sm:$0xf]
  %v21 = vld [vmem:[%s0 + $0x30] sm:$0x1]
  %v22 = vunpack.c.l.bf16 %v21
  %v23 = vlaneseq
  %v24 = vshrl.u32 %v23, 7
  %v25 = vsub.s32 0, %v24
  %v26 = vrot.slane %v22, %v25
  %v27 = vld [vmem:[%s0 + $0x38] sm:$0xf]
  %v28 = vld [vmem:[%s0 + $0x3c] sm:$0xf]
  %v29 = vld [vmem:[%s0 + $0x40] sm:$0xf]
  %v30 = vld [vmem:[%s0 + $0x44] sm:$0xf]
  %v31 = vld [vmem:[%s0 + $0x50] sm:$0xf]
  %v32 = vld [vmem:[%s0 + $0x54] sm:$0xf]
  %v33 = vld [vmem:[%s0 + $0x58] sm:$0xf]
  %v34 = vld [vmem:[%s0 + $0x5c] sm:$0xf]
  %v35 = vld [vmem:[%s0 + $0x60] sm:$0xf]
  %v36 = vld [vmem:[%s0 + $0x64] sm:$0xf]
  %v37 = vld [vmem:[%s0 + $0x68] sm:$0xf]
  %v38 = vld [vmem:[%s0 + $0x6c] sm:$0xf]
  %v39 = vld [vmem:[%s0 + $0x70] sm:$0xf]
  %v40 = vld [vmem:[%s0 + $0x74] sm:$0xf]
  %v41 = vld [vmem:[%s0 + $0x78] sm:$0xf]
  %v42 = vld [vmem:[%s0 + $0x7c] sm:$0xf]
  %v43 = vld [vmem:[%s0 + $0x80] sm:$0xf]
  %v44 = vld [vmem:[%s0 + $0x84] sm:$0xf]
  %v45 = vld [vmem:[%s0 + $0x88] sm:$0xf]
  %v46 = vld [vmem:[%s0 + $0x8c] sm:$0xf]
  %v47 = vld [vmem:[%s0 + $0x48] sm:$0x1]
  %v48 = vunpack.c.l.bf16 %v47
  %v49 = vlaneseq
  %v50 = vshrl.u32 %v49, 7
  %v51 = vsub.s32 0, %v50
  %v52 = vrot.slane %v48, %v51
  %v53 = vld [vmem:[%s0 + $0x90] sm:$0x1]
  %v54 = vunpack.c.l.bf16 %v53
  %v55 = vlaneseq
  %v56 = vshrl.u32 %v55, 7
  %v57 = vsub.s32 0, %v56
  %v58 = vrot.slane %v54, %v57
  %v59 = vld [vmem:[%s0 + $0x98] sm:$0xf]
  %v60 = vld [vmem:[%s0 + $0x9c] sm:$0xf]
  %v61 = vld [vmem:[%s0 + $0xa0] sm:$0xf]
  %v62 = vld [vmem:[%s0 + $0xa4] sm:$0xf]
  %v63 = vld [vmem:[%s0 + $0xa8] sm:$0xf]
  %v64 = vld [vmem:[%s0 + $0xac] sm:$0xf]
  %v65 = vld [vmem:[%s0 + $0xb0] sm:$0xf]
  %v66 = vld [vmem:[%s0 + $0xb4] sm:$0xf]
  %v67 = vunpack.c.l.bf16 %v59
  %v68 = vunpack.c.l.bf16 %v60
  %v69 = vunpack.c.l.bf16 %v61
  %v70 = vunpack.c.l.bf16 %v62
  %v71 = vunpack.c.l.bf16 %v63
  %v72 = vunpack.c.l.bf16 %v64
  %v73 = vunpack.c.l.bf16 %v65
  %v74 = vunpack.c.l.bf16 %v66
  %v79 = vunpack.c.l.b16 %v9
  %v80 = vunpack.c.l.b16 %v10
  %v81 = vunpack.c.l.b16 %v11
  %v82 = vunpack.c.l.b16 %v12
  %v83 = vpack.c.b16 %v80, %v79
  %v84 = vpack.c.b16 %v82, %v81
  %vm87 = vcmask 261120
  %v89 = vsel %vm87, 0, 0
  %91 = vmatprep.subr.bf16.mxu0 0
  %92 = vmatpush1.bf16.msra.mxu0 %v83
  %93 = vmatprep.subr.bf16.mxu0 0
  %94 = vmatpush1.bf16.msra.mxu0 %v84
  %95 = vmatprep.subr.bf16.mxu0 0
  %96 = vmatpush1.bf16.msra.mxu0 0
  %97 = vmatprep.subr.bf16.mxu0 0
  %98 = vmatpush1.bf16.msra.mxu0 0
  %99 = vmatprep.subr.bf16.mxu0 0
  %100 = vmatpush1.bf16.msra.mxu0 0
  %101 = vmatprep.subr.bf16.mxu0 0
  %102 = vmatpush1.bf16.msra.mxu0 0
  %103 = vmatprep.subr.bf16.mxu0 0
  %104 = vmatpush1.bf16.msra.mxu0 0
  %105 = vmatprep.subr.bf16.mxu0 0
  %106 = vmatpush1.bf16.msra.mxu0 0
  %107 = vmatprep.subr.bf16.mxu0 0
  %108 = vmatpush1.bf16.msra.mxu0 0
  %109 = vmatprep.subr.bf16.mxu0 0
  %110 = vmatpush1.bf16.msra.mxu0 0
  %111 = vmatprep.subr.bf16.mxu0 0
  %112 = vmatpush1.bf16.msra.mxu0 0
  %113 = vmatprep.subr.bf16.mxu0 0
  %114 = vmatpush1.bf16.msra.mxu0 0
  %115 = vmatprep.subr.bf16.mxu0 0
  %116 = vmatpush1.bf16.msra.mxu0 0
  %117 = vmatprep.subr.bf16.mxu0 0
  %118 = vmatpush1.bf16.msra.mxu0 0
  %119 = vmatprep.subr.bf16.mxu0 0
  %120 = vmatpush1.bf16.msra.mxu0 0
  %121 = vmatprep.subr.bf16.mxu0 0
  %122 = vmatpush1.bf16.msra.mxu0 0
  %123 = vmatprep.mubr.bf16.mxu0 0
  %124 = vmatmul.mubr.bf16.gmra.mrb[0].mxu0 %v89
  %v125 = vpop.f32.mrb[0].mxu0
  %v126 = vadd.f32 0.0, %v125
  %v127 = vpop.f32.mrb[0].mxu0
  %v128 = vpop.f32.mrb[0].mxu0
  %v129 = vpop.f32.mrb[0].mxu0
  %130 = vdwg.mxu0
  %v131 = vadd.f32 %v67, %v126
  %v132 = vxor.u32 %v131, 2147483648
  %v133 = vmul.f32 %v132, 1.442695
  %v134 = vpow.pop %v133
  %v135 = vadd.f32 %v134, 1.0
  %v136 = vrcp.pop %v135
  %v137 = vmul.f32 1.0, %v136
  %v138 = vtanh.pop %v131
  %v139 = vmul.f32 %v137, 0.0
  %141 = vrot.lane.b32.xlu0 %v138, 64
  %v142 = vpop.permute.xlu0 %141
  %v144 = vmul.f32 %v137, %v142
  %146 = vrot.lane.b32.xlu0 %v144, 32
  %v147 = vpop.permute.xlu0 %146
  %v149 = vadd.f32 %v139, %v147
  %v150 = vtanh.pop %v149
  %152 = vrot.lane.b32.xlu0 %v150, 64
  %v153 = vpop.permute.xlu0 %152
  %v155 = vmul.f32 %v137, %v153
  %v156 = vpack.c.bf16 %v155, %v155
  %v161 = vunpack.c.l.b16 %v17
  %v162 = vunpack.c.l.b16 %v18
  %v163 = vunpack.c.l.b16 %v19
  %v164 = vunpack.c.l.b16 %v20
  %v165 = vpack.c.b16 %v162, %v161
  %v166 = vpack.c.b16 %v164, %v163
  %169 = vmatprep.subr.bf16.mxu0 0
  %170 = vmatpush1.bf16.msra.mxu0 %v165
  %171 = vmatprep.subr.bf16.mxu0 0
  %172 = vmatpush1.bf16.msra.mxu0 %v166
  %173 = vmatprep.subr.bf16.mxu0 0
  %174 = vmatpush1.bf16.msra.mxu0 0
  %175 = vmatprep.subr.bf16.mxu0 0
  %176 = vmatpush1.bf16.msra.mxu0 0
  %177 = vmatprep.subr.bf16.mxu0 0
  %178 = vmatpush1.bf16.msra.mxu0 0
  %179 = vmatprep.subr.bf16.mxu0 0
  %180 = vmatpush1.bf16.msra.mxu0 0
  %181 = vmatprep.subr.bf16.mxu0 0
  %182 = vmatpush1.bf16.msra.mxu0 0
  %183 = vmatprep.subr.bf16.mxu0 0
  %184 = vmatpush1.bf16.msra.mxu0 0
  %185 = vmatprep.subr.bf16.mxu0 0
  %186 = vmatpush1.bf16.msra.mxu0 0
  %187 = vmatprep.subr.bf16.mxu0 0
  %188 = vmatpush1.bf16.msra.mxu0 0
  %189 = vmatprep.subr.bf16.mxu0 0
  %190 = vmatpush1.bf16.msra.mxu0 0
  %191 = vmatprep.subr.bf16.mxu0 0
  %192 = vmatpush1.bf16.msra.mxu0 0
  %193 = vmatprep.subr.bf16.mxu0 0
  %194 = vmatpush1.bf16.msra.mxu0 0
  %195 = vmatprep.subr.bf16.mxu0 0
  %196 = vmatpush1.bf16.msra.mxu0 0
  %197 = vmatprep.subr.bf16.mxu0 0
  %198 = vmatpush1.bf16.msra.mxu0 0
  %199 = vmatprep.subr.bf16.mxu0 0
  %200 = vmatpush1.bf16.msra.mxu0 0
  %201 = vmatprep.mubr.bf16.mxu0 0
  %202 = vmatmul.mubr.bf16.gmra.mrb[0].mxu0 %v89
  %v203 = vpop.f32.mrb[0].mxu0
  %v204 = vadd.f32 0.0, %v203
  %v205 = vpop.f32.mrb[0].mxu0
  %v206 = vpop.f32.mrb[0].mxu0
  %v207 = vpop.f32.mrb[0].mxu0
  %208 = vdwg.mxu0
  %210 = vrot.lane.b32.xlu0 %v156, 32
  %v211 = vpop.permute.xlu0 %210
  %v216 = vunpack.c.l.b16 %v13
  %v217 = vunpack.c.l.b16 %v14
  %v218 = vunpack.c.l.b16 %v15
  %v219 = vunpack.c.l.b16 %v16
  %v220 = vpack.c.b16 %v217, %v216
  %v221 = vpack.c.b16 %v219, %v218
  %v225 = vsel %vm87, %v211, 0
  %227 = vmatprep.subr.bf16.mxu0 0
  %228 = vmatpush1.bf16.msra.mxu0 %v220
  %229 = vmatprep.subr.bf16.mxu0 0
  %230 = vmatpush1.bf16.msra.mxu0 %v221
  %231 = vmatprep.subr.bf16.mxu0 0
  %232 = vmatpush1.bf16.msra.mxu0 0
  %233 = vmatprep.subr.bf16.mxu0 0
  %234 = vmatpush1.bf16.msra.mxu0 0
  %235 = vmatprep.subr.bf16.mxu0 0
  %236 = vmatpush1.bf16.msra.mxu0 0
  %237 = vmatprep.subr.bf16.mxu0 0
  %238 = vmatpush1.bf16.msra.mxu0 0
  %239 = vmatprep.subr.bf16.mxu0 0
  %240 = vmatpush1.bf16.msra.mxu0 0
  %241 = vmatprep.subr.bf16.mxu0 0
  %242 = vmatpush1.bf16.msra.mxu0 0
  %243 = vmatprep.subr.bf16.mxu0 0
  %244 = vmatpush1.bf16.msra.mxu0 0
  %245 = vmatprep.subr.bf16.mxu0 0
  %246 = vmatpush1.bf16.msra.mxu0 0
  %247 = vmatprep.subr.bf16.mxu0 0
  %248 = vmatpush1.bf16.msra.mxu0 0
  %249 = vmatprep.subr.bf16.mxu0 0
  %250 = vmatpush1.bf16.msra.mxu0 0
  %251 = vmatprep.subr.bf16.mxu0 0
  %252 = vmatpush1.bf16.msra.mxu0 0
  %253 = vmatprep.subr.bf16.mxu0 0
  %254 = vmatpush1.bf16.msra.mxu0 0
  %255 = vmatprep.subr.bf16.mxu0 0
  %256 = vmatpush1.bf16.msra.mxu0 0
  %257 = vmatprep.subr.bf16.mxu0 0
  %258 = vmatpush1.bf16.msra.mxu0 0
  %259 = vmatprep.mubr.bf16.mxu0 0
  %260 = vmatmul.mubr.bf16.gmra.mrb[0].mxu0 %v225
  %v261 = vpop.f32.mrb[0].mxu0
  %v262 = vadd.f32 %v204, %v261
  %v263 = vpop.f32.mrb[0].mxu0
  %v264 = vpop.f32.mrb[0].mxu0
  %v265 = vpop.f32.mrb[0].mxu0
  %266 = vdwg.mxu0
  %v267 = vadd.f32 %v262, %v26
  %v268 = vxor.u32 %v267, 2147483648
  %v269 = vmul.f32 %v268, 1.442695
  %v270 = vpow.pop %v269
  %v271 = vadd.f32 %v270, 1.0
  %v272 = vrcp.pop %v271
  %v273 = vmul.f32 1.0, %v272
  %v274 = vtanh.pop %v267
  %v275 = vmul.f32 %v273, 0.0
  %277 = vrot.lane.b32.xlu0 %v274, 64
  %v278 = vpop.permute.xlu0 %277
  %v280 = vmul.f32 %v273, %v278
  %282 = vrot.lane.b32.xlu0 %v280, 32
  %v283 = vpop.permute.xlu0 %282
  %v285 = vadd.f32 %v275, %v283
  %v286 = vtanh.pop %v285
  %288 = vrot.lane.b32.xlu0 %v286, 64
  %v289 = vpop.permute.xlu0 %288
  %v291 = vmul.f32 %v273, %v289
  %292 = vmatprep.subr.bf16.mxu0 0
  %293 = vmatpush1.bf16.msra.mxu0 %v83
  %294 = vmatprep.subr.bf16.mxu0 0
  %295 = vmatpush1.bf16.msra.mxu0 %v84
  %296 = vmatprep.subr.bf16.mxu0 0
  %297 = vmatpush1.bf16.msra.mxu0 0
  %298 = vmatprep.subr.bf16.mxu0 0
  %299 = vmatpush1.bf16.msra.mxu0 0
  %300 = vmatprep.subr.bf16.mxu0 0
  %301 = vmatpush1.bf16.msra.mxu0 0
  %302 = vmatprep.subr.bf16.mxu0 0
  %303 = vmatpush1.bf16.msra.mxu0 0
  %304 = vmatprep.subr.bf16.mxu0 0
  %305 = vmatpush1.bf16.msra.mxu0 0
  %306 = vmatprep.subr.bf16.mxu0 0
  %307 = vmatpush1.bf16.msra.mxu0 0
  %308 = vmatprep.subr.bf16.mxu0 0
  %309 = vmatpush1.bf16.msra.mxu0 0
  %310 = vmatprep.subr.bf16.mxu0 0
  %311 = vmatpush1.bf16.msra.mxu0 0
  %312 = vmatprep.subr.bf16.mxu0 0
  %313 = vmatpush1.bf16.msra.mxu0 0
  %314 = vmatprep.subr.bf16.mxu0 0
  %315 = vmatpush1.bf16.msra.mxu0 0
  %316 = vmatprep.subr.bf16.mxu0 0
  %317 = vmatpush1.bf16.msra.mxu0 0
  %318 = vmatprep.subr.bf16.mxu0 0
  %319 = vmatpush1.bf16.msra.mxu0 0
  %320 = vmatprep.subr.bf16.mxu0 0
  %321 = vmatpush1.bf16.msra.mxu0 0
  %322 = vmatprep.subr.bf16.mxu0 0
  %323 = vmatpush1.bf16.msra.mxu0 0
  %324 = vmatprep.mubr.bf16.mxu0 0
  %325 = vmatmul.mubr.bf16.gmra.mrb[0].mxu0 %v225
  %v326 = vpop.f32.mrb[0].mxu0
  %v327 = vadd.f32 0.0, %v326
  %v328 = vpop.f32.mrb[0].mxu0
  %v329 = vpop.f32.mrb[0].mxu0
  %v330 = vpop.f32.mrb[0].mxu0
  %331 = vdwg.mxu0
  %v332 = vadd.f32 %v68, %v327
  %v333 = vxor.u32 %v332, 2147483648
  %v334 = vmul.f32 %v333, 1.442695
  %v335 = vpow.pop %v334
  %v336 = vadd.f32 %v335, 1.0
  %v337 = vrcp.pop %v336
  %v338 = vmul.f32 1.0, %v337
  %v339 = vtanh.pop %v332
  %v340 = vmul.f32 %v338, %v149
  %342 = vrot.lane.b32.xlu0 %v339, 64
  %v343 = vpop.permute.xlu0 %342
  %v345 = vmul.f32 %v338, %v343
  %347 = vrot.lane.b32.xlu0 %v345, 32
  %v348 = vpop.permute.xlu0 %347
  %v350 = vadd.f32 %v340, %v348
  %v351 = vtanh.pop %v350
  %353 = vrot.lane.b32.xlu0 %v351, 64
  %v354 = vpop.permute.xlu0 %353
  %v356 = vmul.f32 %v338, %v354
  %v357 = vpack.c.bf16 %v356, %v356
  %v358 = vpack.c.bf16 %v291, %v291
  %360 = vrot.lane.b32.xlu0 %v358, 32
  %v361 = vpop.permute.xlu0 %360
  %v363 = vsel %vm87, %v361, 0
  %365 = vmatprep.subr.bf16.mxu0 0
  %366 = vmatpush1.bf16.msra.mxu0 %v165
  %367 = vmatprep.subr.bf16.mxu0 0
  %368 = vmatpush1.bf16.msra.mxu0 %v166
  %369 = vmatprep.subr.bf16.mxu0 0
  %370 = vmatpush1.bf16.msra.mxu0 0
  %371 = vmatprep.subr.bf16.mxu0 0
  %372 = vmatpush1.bf16.msra.mxu0 0
  %373 = vmatprep.subr.bf16.mxu0 0
  %374 = vmatpush1.bf16.msra.mxu0 0
  %375 = vmatprep.subr.bf16.mxu0 0
  %376 = vmatpush1.bf16.msra.mxu0 0
  %377 = vmatprep.subr.bf16.mxu0 0
  %378 = vmatpush1.bf16.msra.mxu0 0
  %379 = vmatprep.subr.bf16.mxu0 0
  %380 = vmatpush1.bf16.msra.mxu0 0
  %381 = vmatprep.subr.bf16.mxu0 0
  %382 = vmatpush1.bf16.msra.mxu0 0
  %383 = vmatprep.subr.bf16.mxu0 0
  %384 = vmatpush1.bf16.msra.mxu0 0
  %385 = vmatprep.subr.bf16.mxu0 0
  %386 = vmatpush1.bf16.msra.mxu0 0
  %387 = vmatprep.subr.bf16.mxu0 0
  %388 = vmatpush1.bf16.msra.mxu0 0
  %389 = vmatprep.subr.bf16.mxu0 0
  %390 = vmatpush1.bf16.msra.mxu0 0
  %391 = vmatprep.subr.bf16.mxu0 0
  %392 = vmatpush1.bf16.msra.mxu0 0
  %393 = vmatprep.subr.bf16.mxu0 0
  %394 = vmatpush1.bf16.msra.mxu0 0
  %395 = vmatprep.subr.bf16.mxu0 0
  %396 = vmatpush1.bf16.msra.mxu0 0
  %397 = vmatprep.mubr.bf16.mxu0 0
  %398 = vmatmul.mubr.bf16.gmra.mrb[0].mxu0 %v363
  %v399 = vpop.f32.mrb[0].mxu0
  %v400 = vadd.f32 0.0, %v399
  %v401 = vpop.f32.mrb[0].mxu0
  %v402 = vpop.f32.mrb[0].mxu0
  %v403 = vpop.f32.mrb[0].mxu0
  %404 = vdwg.mxu0
  %406 = vrot.lane.b32.xlu0 %v357, 32
  %v407 = vpop.permute.xlu0 %406
  %v409 = vsel %vm87, %v407, 0
  %411 = vmatprep.subr.bf16.mxu0 0
  %412 = vmatpush1.bf16.msra.mxu0 %v220
  %413 = vmatprep.subr.bf16.mxu0 0
  %414 = vmatpush1.bf16.msra.mxu0 %v221
  %415 = vmatprep.subr.bf16.mxu0 0
  %416 = vmatpush1.bf16.msra.mxu0 0
  %417 = vmatprep.subr.bf16.mxu0 0
  %418 = vmatpush1.bf16.msra.mxu0 0
  %419 = vmatprep.subr.bf16.mxu0 0
  %420 = vmatpush1.bf16.msra.mxu0 0
  %421 = vmatprep.subr.bf16.mxu0 0
  %422 = vmatpush1.bf16.msra.mxu0 0
  %423 = vmatprep.subr.bf16.mxu0 0
  %424 = vmatpush1.bf16.msra.mxu0 0
  %425 = vmatprep.subr.bf16.mxu0 0
  %426 = vmatpush1.bf16.msra.mxu0 0
  %427 = vmatprep.subr.bf16.mxu0 0
  %428 = vmatpush1.bf16.msra.mxu0 0
  %429 = vmatprep.subr.bf16.mxu0 0
  %430 = vmatpush1.bf16.msra.mxu0 0
  %431 = vmatprep.subr.bf16.mxu0 0
  %432 = vmatpush1.bf16.msra.mxu0 0
  %433 = vmatprep.subr.bf16.mxu0 0
  %434 = vmatpush1.bf16.msra.mxu0 0
  %435 = vmatprep.subr.bf16.mxu0 0
  %436 = vmatpush1.bf16.msra.mxu0 0
  %437 = vmatprep.subr.bf16.mxu0 0
  %438 = vmatpush1.bf16.msra.mxu0 0
  %439 = vmatprep.subr.bf16.mxu0 0
  %440 = vmatpush1.bf16.msra.mxu0 0
  %441 = vmatprep.subr.bf16.mxu0 0
  %442 = vmatpush1.bf16.msra.mxu0 0
  %443 = vmatprep.mubr.bf16.mxu0 0
  %444 = vmatmul.mubr.bf16.gmra.mrb[0].mxu0 %v409
  %v445 = vpop.f32.mrb[0].mxu0
  %v446 = vadd.f32 %v400, %v445
  %v447 = vpop.f32.mrb[0].mxu0
  %v448 = vpop.f32.mrb[0].mxu0
  %v449 = vpop.f32.mrb[0].mxu0
  %450 = vdwg.mxu0
  %v451 = vadd.f32 %v446, %v26
  %v452 = vxor.u32 %v451, 2147483648
  %v453 = vmul.f32 %v452, 1.442695
  %v454 = vpow.pop %v453
  %v455 = vadd.f32 %v454, 1.0
  %v456 = vrcp.pop %v455
  %v457 = vmul.f32 1.0, %v456
  %v458 = vtanh.pop %v451
  %v459 = vmul.f32 %v457, %v285
  %461 = vrot.lane.b32.xlu0 %v458, 64
  %v462 = vpop.permute.xlu0 %461
  %v464 = vmul.f32 %v457, %v462
  %466 = vrot.lane.b32.xlu0 %v464, 32
  %v467 = vpop.permute.xlu0 %466
  %v469 = vadd.f32 %v459, %v467
  %v470 = vtanh.pop %v469
  %472 = vrot.lane.b32.xlu0 %v470, 64
  %v473 = vpop.permute.xlu0 %472
  %v475 = vmul.f32 %v457, %v473
  %476 = vmatprep.subr.bf16.mxu0 0
  %477 = vmatpush1.bf16.msra.mxu0 %v83
  %478 = vmatprep.subr.bf16.mxu0 0
  %479 = vmatpush1.bf16.msra.mxu0 %v84
  %480 = vmatprep.subr.bf16.mxu0 0
  %481 = vmatpush1.bf16.msra.mxu0 0
  %482 = vmatprep.subr.bf16.mxu0 0
  %483 = vmatpush1.bf16.msra.mxu0 0
  %484 = vmatprep.subr.bf16.mxu0 0
  %485 = vmatpush1.bf16.msra.mxu0 0
  %486 = vmatprep.subr.bf16.mxu0 0
  %487 = vmatpush1.bf16.msra.mxu0 0
  %488 = vmatprep.subr.bf16.mxu0 0
  %489 = vmatpush1.bf16.msra.mxu0 0
  %490 = vmatprep.subr.bf16.mxu0 0
  %491 = vmatpush1.bf16.msra.mxu0 0
  %492 = vmatprep.subr.bf16.mxu0 0
  %493 = vmatpush1.bf16.msra.mxu0 0
  %494 = vmatprep.subr.bf16.mxu0 0
  %495 = vmatpush1.bf16.msra.mxu0 0
  %496 = vmatprep.subr.bf16.mxu0 0
  %497 = vmatpush1.bf16.msra.mxu0 0
  %498 = vmatprep.subr.bf16.mxu0 0
  %499 = vmatpush1.bf16.msra.mxu0 0
  %500 = vmatprep.subr.bf16.mxu0 0
  %501 = vmatpush1.bf16.msra.mxu0 0
  %502 = vmatprep.subr.bf16.mxu0 0
  %503 = vmatpush1.bf16.msra.mxu0 0
  %504 = vmatprep.subr.bf16.mxu0 0
  %505 = vmatpush1.bf16.msra.mxu0 0
  %506 = vmatprep.subr.bf16.mxu0 0
  %507 = vmatpush1.bf16.msra.mxu0 0
  %508 = vmatprep.mubr.bf16.mxu0 0
  %509 = vmatmul.mubr.bf16.gmra.mrb[0].mxu0 %v409
  %v510 = vpop.f32.mrb[0].mxu0
  %v511 = vadd.f32 0.0, %v510
  %v512 = vpop.f32.mrb[0].mxu0
  %v513 = vpop.f32.mrb[0].mxu0
  %v514 = vpop.f32.mrb[0].mxu0
  %515 = vdwg.mxu0
  %v516 = vadd.f32 %v69, %v511
  %v517 = vxor.u32 %v516, 2147483648
  %v518 = vmul.f32 %v517, 1.442695
  %v519 = vpow.pop %v518
  %v520 = vadd.f32 %v519, 1.0
  %v521 = vrcp.pop %v520
  %v522 = vmul.f32 1.0, %v521
  %v523 = vtanh.pop %v516
  %v524 = vmul.f32 %v522, %v350
  %526 = vrot.lane.b32.xlu0 %v523, 64
  %v527 = vpop.permute.xlu0 %526
  %v529 = vmul.f32 %v522, %v527
  %531 = vrot.lane.b32.xlu0 %v529, 32
  %v532 = vpop.permute.xlu0 %531
  %v534 = vadd.f32 %v524, %v532
  %v535 = vtanh.pop %v534
  %537 = vrot.lane.b32.xlu0 %v535, 64
  %v538 = vpop.permute.xlu0 %537
  %v540 = vmul.f32 %v522, %v538
  %v541 = vpack.c.bf16 %v540, %v540
  %v542 = vpack.c.bf16 %v475, %v475
  %544 = vrot.lane.b32.xlu0 %v542, 32
  %v545 = vpop.permute.xlu0 %544
  %v547 = vsel %vm87, %v545, 0
  %549 = vmatprep.subr.bf16.mxu0 0
  %550 = vmatpush1.bf16.msra.mxu0 %v165
  %551 = vmatprep.subr.bf16.mxu0 0
  %552 = vmatpush1.bf16.msra.mxu0 %v166
  %553 = vmatprep.subr.bf16.mxu0 0
  %554 = vmatpush1.bf16.msra.mxu0 0
  %555 = vmatprep.subr.bf16.mxu0 0
  %556 = vmatpush1.bf16.msra.mxu0 0
  %557 = vmatprep.subr.bf16.mxu0 0
  %558 = vmatpush1.bf16.msra.mxu0 0
  %559 = vmatprep.subr.bf16.mxu0 0
  %560 = vmatpush1.bf16.msra.mxu0 0
  %561 = vmatprep.subr.bf16.mxu0 0
  %562 = vmatpush1.bf16.msra.mxu0 0
  %563 = vmatprep.subr.bf16.mxu0 0
  %564 = vmatpush1.bf16.msra.mxu0 0
  %565 = vmatprep.subr.bf16.mxu0 0
  %566 = vmatpush1.bf16.msra.mxu0 0
  %567 = vmatprep.subr.bf16.mxu0 0
  %568 = vmatpush1.bf16.msra.mxu0 0
  %569 = vmatprep.subr.bf16.mxu0 0
  %570 = vmatpush1.bf16.msra.mxu0 0
  %571 = vmatprep.subr.bf16.mxu0 0
  %572 = vmatpush1.bf16.msra.mxu0 0
  %573 = vmatprep.subr.bf16.mxu0 0
  %574 = vmatpush1.bf16.msra.mxu0 0
  %575 = vmatprep.subr.bf16.mxu0 0
  %576 = vmatpush1.bf16.msra.mxu0 0
  %577 = vmatprep.subr.bf16.mxu0 0
  %578 = vmatpush1.bf16.msra.mxu0 0
  %579 = vmatprep.subr.bf16.mxu0 0
  %580 = vmatpush1.bf16.msra.mxu0 0
  %581 = vmatprep.mubr.bf16.mxu0 0
  %582 = vmatmul.mubr.bf16.gmra.mrb[0].mxu0 %v547
  %v583 = vpop.f32.mrb[0].mxu0
  %v584 = vadd.f32 0.0, %v583
  %v585 = vpop.f32.mrb[0].mxu0
  %v586 = vpop.f32.mrb[0].mxu0
  %v587 = vpop.f32.mrb[0].mxu0
  %588 = vdwg.mxu0
  %590 = vrot.lane.b32.xlu0 %v541, 32
  %v591 = vpop.permute.xlu0 %590
  %v593 = vsel %vm87, %v591, 0
  %595 = vmatprep.subr.bf16.mxu0 0
  %596 = vmatpush1.bf16.msra.mxu0 %v220
  %597 = vmatprep.subr.bf16.mxu0 0
  %598 = vmatpush1.bf16.msra.mxu0 %v221
  %599 = vmatprep.subr.bf16.mxu0 0
  %600 = vmatpush1.bf16.msra.mxu0 0
  %601 = vmatprep.subr.bf16.mxu0 0
  %602 = vmatpush1.bf16.msra.mxu0 0
  %603 = vmatprep.subr.bf16.mxu0 0
  %604 = vmatpush1.bf16.msra.mxu0 0
  %605 = vmatprep.subr.bf16.mxu0 0
  %606 = vmatpush1.bf16.msra.mxu0 0
  %607 = vmatprep.subr.bf16.mxu0 0
  %608 = vmatpush1.bf16.msra.mxu0 0
  %609 = vmatprep.subr.bf16.mxu0 0
  %610 = vmatpush1.bf16.msra.mxu0 0
  %611 = vmatprep.subr.bf16.mxu0 0
  %612 = vmatpush1.bf16.msra.mxu0 0
  %613 = vmatprep.subr.bf16.mxu0 0
  %614 = vmatpush1.bf16.msra.mxu0 0
  %615 = vmatprep.subr.bf16.mxu0 0
  %616 = vmatpush1.bf16.msra.mxu0 0
  %617 = vmatprep.subr.bf16.mxu0 0
  %618 = vmatpush1.bf16.msra.mxu0 0
  %619 = vmatprep.subr.bf16.mxu0 0
  %620 = vmatpush1.bf16.msra.mxu0 0
  %621 = vmatprep.subr.bf16.mxu0 0
  %622 = vmatpush1.bf16.msra.mxu0 0
  %623 = vmatprep.subr.bf16.mxu0 0
  %624 = vmatpush1.bf16.msra.mxu0 0
  %625 = vmatprep.subr.bf16.mxu0 0
  %626 = vmatpush1.bf16.msra.mxu0 0
  %627 = vmatprep.mubr.bf16.mxu0 0
  %628 = vmatmul.mubr.bf16.gmra.mrb[0].mxu0 %v593
  %v629 = vpop.f32.mrb[0].mxu0
  %v630 = vadd.f32 %v584, %v629
  %v631 = vpop.f32.mrb[0].mxu0
  %v632 = vpop.f32.mrb[0].mxu0
  %v633 = vpop.f32.mrb[0].mxu0
  %634 = vdwg.mxu0
  %v635 = vadd.f32 %v630, %v26
  %v636 = vxor.u32 %v635, 2147483648
  %v637 = vmul.f32 %v636, 1.442695
  %v638 = vpow.pop %v637
  %v639 = vadd.f32 %v638, 1.0
  %v640 = vrcp.pop %v639
  %v641 = vmul.f32 1.0, %v640
  %v642 = vtanh.pop %v635
  %v643 = vmul.f32 %v641, %v469
  %645 = vrot.lane.b32.xlu0 %v642, 64
  %v646 = vpop.permute.xlu0 %645
  %v648 = vmul.f32 %v641, %v646
  %650 = vrot.lane.b32.xlu0 %v648, 32
  %v651 = vpop.permute.xlu0 %650
  %v653 = vadd.f32 %v643, %v651
  %v654 = vtanh.pop %v653
  %656 = vrot.lane.b32.xlu0 %v654, 64
  %v657 = vpop.permute.xlu0 %656
  %v659 = vmul.f32 %v641, %v657
  %660 = vmatprep.subr.bf16.mxu0 0
  %661 = vmatpush1.bf16.msra.mxu0 %v83
  %662 = vmatprep.subr.bf16.mxu0 0
  %663 = vmatpush1.bf16.msra.mxu0 %v84
  %664 = vmatprep.subr.bf16.mxu0 0
  %665 = vmatpush1.bf16.msra.mxu0 0
  %666 = vmatprep.subr.bf16.mxu0 0
  %667 = vmatpush1.bf16.msra.mxu0 0
  %668 = vmatprep.subr.bf16.mxu0 0
  %669 = vmatpush1.bf16.msra.mxu0 0
  %670 = vmatprep.subr.bf16.mxu0 0
  %671 = vmatpush1.bf16.msra.mxu0 0
  %672 = vmatprep.subr.bf16.mxu0 0
  %673 = vmatpush1.bf16.msra.mxu0 0
  %674 = vmatprep.subr.bf16.mxu0 0
  %675 = vmatpush1.bf16.msra.mxu0 0
  %676 = vmatprep.subr.bf16.mxu0 0
  %677 = vmatpush1.bf16.msra.mxu0 0
  %678 = vmatprep.subr.bf16.mxu0 0
  %679 = vmatpush1.bf16.msra.mxu0 0
  %680 = vmatprep.subr.bf16.mxu0 0
  %681 = vmatpush1.bf16.msra.mxu0 0
  %682 = vmatprep.subr.bf16.mxu0 0
  %683 = vmatpush1.bf16.msra.mxu0 0
  %684 = vmatprep.subr.bf16.mxu0 0
  %685 = vmatpush1.bf16.msra.mxu0 0
  %686 = vmatprep.subr.bf16.mxu0 0
  %687 = vmatpush1.bf16.msra.mxu0 0
  %688 = vmatprep.subr.bf16.mxu0 0
  %689 = vmatpush1.bf16.msra.mxu0 0
  %690 = vmatprep.subr.bf16.mxu0 0
  %691 = vmatpush1.bf16.msra.mxu0 0
  %692 = vmatprep.mubr.bf16.mxu0 0
  %693 = vmatmul.mubr.bf16.gmra.mrb[0].mxu0 %v593
  %v694 = vpop.f32.mrb[0].mxu0
  %v695 = vadd.f32 0.0, %v694
  %v696 = vpop.f32.mrb[0].mxu0
  %v697 = vpop.f32.mrb[0].mxu0
  %v698 = vpop.f32.mrb[0].mxu0
  %699 = vdwg.mxu0
  %v700 = vadd.f32 %v70, %v695
  %v701 = vxor.u32 %v700, 2147483648
  %v702 = vmul.f32 %v701, 1.442695
  %v703 = vpow.pop %v702
  %v704 = vadd.f32 %v703, 1.0
  %v705 = vrcp.pop %v704
  %v706 = vmul.f32 1.0, %v705
  %v707 = vtanh.pop %v700
  %v708 = vmul.f32 %v706, %v534
  %710 = vrot.lane.b32.xlu0 %v707, 64
  %v711 = vpop.permute.xlu0 %710
  %v713 = vmul.f32 %v706, %v711
  %715 = vrot.lane.b32.xlu0 %v713, 32
  %v716 = vpop.permute.xlu0 %715
  %v718 = vadd.f32 %v708, %v716
  %v719 = vtanh.pop %v718
  %721 = vrot.lane.b32.xlu0 %v719, 64
  %v722 = vpop.permute.xlu0 %721
  %v724 = vmul.f32 %v706, %v722
  %v725 = vpack.c.bf16 %v724, %v724
  %v726 = vpack.c.bf16 %v659, %v659
  %728 = vrot.lane.b32.xlu0 %v726, 32
  %v729 = vpop.permute.xlu0 %728
  %v731 = vsel %vm87, %v729, 0
  %733 = vmatprep.subr.bf16.mxu0 0
  %734 = vmatpush1.bf16.msra.mxu0 %v165
  %735 = vmatprep.subr.bf16.mxu0 0
  %736 = vmatpush1.bf16.msra.mxu0 %v166
  %737 = vmatprep.subr.bf16.mxu0 0
  %738 = vmatpush1.bf16.msra.mxu0 0
  %739 = vmatprep.subr.bf16.mxu0 0
  %740 = vmatpush1.bf16.msra.mxu0 0
  %741 = vmatprep.subr.bf16.mxu0 0
  %742 = vmatpush1.bf16.msra.mxu0 0
  %743 = vmatprep.subr.bf16.mxu0 0
  %744 = vmatpush1.bf16.msra.mxu0 0
  %745 = vmatprep.subr.bf16.mxu0 0
  %746 = vmatpush1.bf16.msra.mxu0 0
  %747 = vmatprep.subr.bf16.mxu0 0
  %748 = vmatpush1.bf16.msra.mxu0 0
  %749 = vmatprep.subr.bf16.mxu0 0
  %750 = vmatpush1.bf16.msra.mxu0 0
  %751 = vmatprep.subr.bf16.mxu0 0
  %752 = vmatpush1.bf16.msra.mxu0 0
  %753 = vmatprep.subr.bf16.mxu0 0
  %754 = vmatpush1.bf16.msra.mxu0 0
  %755 = vmatprep.subr.bf16.mxu0 0
  %756 = vmatpush1.bf16.msra.mxu0 0
  %757 = vmatprep.subr.bf16.mxu0 0
  %758 = vmatpush1.bf16.msra.mxu0 0
  %759 = vmatprep.subr.bf16.mxu0 0
  %760 = vmatpush1.bf16.msra.mxu0 0
  %761 = vmatprep.subr.bf16.mxu0 0
  %762 = vmatpush1.bf16.msra.mxu0 0
  %763 = vmatprep.subr.bf16.mxu0 0
  %764 = vmatpush1.bf16.msra.mxu0 0
  %765 = vmatprep.mubr.bf16.mxu0 0
  %766 = vmatmul.mubr.bf16.gmra.mrb[0].mxu0 %v731
  %v767 = vpop.f32.mrb[0].mxu0
  %v768 = vadd.f32 0.0, %v767
  %v769 = vpop.f32.mrb[0].mxu0
  %v770 = vpop.f32.mrb[0].mxu0
  %v771 = vpop.f32.mrb[0].mxu0
  %772 = vdwg.mxu0
  %774 = vrot.lane.b32.xlu0 %v725, 32
  %v775 = vpop.permute.xlu0 %774
  %v777 = vsel %vm87, %v775, 0
  %779 = vmatprep.subr.bf16.mxu0 0
  %780 = vmatpush1.bf16.msra.mxu0 %v220
  %781 = vmatprep.subr.bf16.mxu0 0
  %782 = vmatpush1.bf16.msra.mxu0 %v221
  %783 = vmatprep.subr.bf16.mxu0 0
  %784 = vmatpush1.bf16.msra.mxu0 0
  %785 = vmatprep.subr.bf16.mxu0 0
  %786 = vmatpush1.bf16.msra.mxu0 0
  %787 = vmatprep.subr.bf16.mxu0 0
  %788 = vmatpush1.bf16.msra.mxu0 0
  %789 = vmatprep.subr.bf16.mxu0 0
  %790 = vmatpush1.bf16.msra.mxu0 0
  %791 = vmatprep.subr.bf16.mxu0 0
  %792 = vmatpush1.bf16.msra.mxu0 0
  %793 = vmatprep.subr.bf16.mxu0 0
  %794 = vmatpush1.bf16.msra.mxu0 0
  %795 = vmatprep.subr.bf16.mxu0 0
  %796 = vmatpush1.bf16.msra.mxu0 0
  %797 = vmatprep.subr.bf16.mxu0 0
  %798 = vmatpush1.bf16.msra.mxu0 0
  %799 = vmatprep.subr.bf16.mxu0 0
  %800 = vmatpush1.bf16.msra.mxu0 0
  %801 = vmatprep.subr.bf16.mxu0 0
  %802 = vmatpush1.bf16.msra.mxu0 0
  %803 = vmatprep.subr.bf16.mxu0 0
  %804 = vmatpush1.bf16.msra.mxu0 0
  %805 = vmatprep.subr.bf16.mxu0 0
  %806 = vmatpush1.bf16.msra.mxu0 0
  %807 = vmatprep.subr.bf16.mxu0 0
  %808 = vmatpush1.bf16.msra.mxu0 0
  %809 = vmatprep.subr.bf16.mxu0 0
  %810 = vmatpush1.bf16.msra.mxu0 0
  %811 = vmatprep.mubr.bf16.mxu0 0
  %812 = vmatmul.mubr.bf16.gmra.mrb[0].mxu0 %v777
  %v813 = vpop.f32.mrb[0].mxu0
  %v814 = vadd.f32 %v768, %v813
  %v815 = vpop.f32.mrb[0].mxu0
  %v816 = vpop.f32.mrb[0].mxu0
  %v817 = vpop.f32.mrb[0].mxu0
  %818 = vdwg.mxu0
  %v819 = vadd.f32 %v814, %v26
  %v820 = vxor.u32 %v819, 2147483648
  %v821 = vmul.f32 %v820, 1.442695
  %v822 = vpow.pop %v821
  %v823 = vadd.f32 %v822, 1.0
  %v824 = vrcp.pop %v823
  %v825 = vmul.f32 1.0, %v824
  %v826 = vtanh.pop %v819
  %v827 = vmul.f32 %v825, %v653
  %829 = vrot.lane.b32.xlu0 %v826, 64
  %v830 = vpop.permute.xlu0 %829
  %v832 = vmul.f32 %v825, %v830
  %834 = vrot.lane.b32.xlu0 %v832, 32
  %v835 = vpop.permute.xlu0 %834
  %v837 = vadd.f32 %v827, %v835
  %v838 = vtanh.pop %v837
  %840 = vrot.lane.b32.xlu0 %v838, 64
  %v841 = vpop.permute.xlu0 %840
  %v843 = vmul.f32 %v825, %v841
  %844 = vmatprep.subr.bf16.mxu0 0
  %845 = vmatpush1.bf16.msra.mxu0 %v83
  %846 = vmatprep.subr.bf16.mxu0 0
  %847 = vmatpush1.bf16.msra.mxu0 %v84
  %848 = vmatprep.subr.bf16.mxu0 0
  %849 = vmatpush1.bf16.msra.mxu0 0
  %850 = vmatprep.subr.bf16.mxu0 0
  %851 = vmatpush1.bf16.msra.mxu0 0
  %852 = vmatprep.subr.bf16.mxu0 0
  %853 = vmatpush1.bf16.msra.mxu0 0
  %854 = vmatprep.subr.bf16.mxu0 0
  %855 = vmatpush1.bf16.msra.mxu0 0
  %856 = vmatprep.subr.bf16.mxu0 0
  %857 = vmatpush1.bf16.msra.mxu0 0
  %858 = vmatprep.subr.bf16.mxu0 0
  %859 = vmatpush1.bf16.msra.mxu0 0
  %860 = vmatprep.subr.bf16.mxu0 0
  %861 = vmatpush1.bf16.msra.mxu0 0
  %862 = vmatprep.subr.bf16.mxu0 0
  %863 = vmatpush1.bf16.msra.mxu0 0
  %864 = vmatprep.subr.bf16.mxu0 0
  %865 = vmatpush1.bf16.msra.mxu0 0
  %866 = vmatprep.subr.bf16.mxu0 0
  %867 = vmatpush1.bf16.msra.mxu0 0
  %868 = vmatprep.subr.bf16.mxu0 0
  %869 = vmatpush1.bf16.msra.mxu0 0
  %870 = vmatprep.subr.bf16.mxu0 0
  %871 = vmatpush1.bf16.msra.mxu0 0
  %872 = vmatprep.subr.bf16.mxu0 0
  %873 = vmatpush1.bf16.msra.mxu0 0
  %874 = vmatprep.subr.bf16.mxu0 0
  %875 = vmatpush1.bf16.msra.mxu0 0
  %876 = vmatprep.mubr.bf16.mxu0 0
  %877 = vmatmul.mubr.bf16.gmra.mrb[0].mxu0 %v777
  %v878 = vpop.f32.mrb[0].mxu0
  %v879 = vadd.f32 0.0, %v878
  %v880 = vpop.f32.mrb[0].mxu0
  %v881 = vpop.f32.mrb[0].mxu0
  %v882 = vpop.f32.mrb[0].mxu0
  %883 = vdwg.mxu0
  %v884 = vadd.f32 %v71, %v879
  %v885 = vxor.u32 %v884, 2147483648
  %v886 = vmul.f32 %v885, 1.442695
  %v887 = vpow.pop %v886
  %v888 = vadd.f32 %v887, 1.0
  %v889 = vrcp.pop %v888
  %v890 = vmul.f32 1.0, %v889
  %v891 = vtanh.pop %v884
  %v892 = vmul.f32 %v890, %v718
  %894 = vrot.lane.b32.xlu0 %v891, 64
  %v895 = vpop.permute.xlu0 %894
  %v897 = vmul.f32 %v890, %v895
  %899 = vrot.lane.b32.xlu0 %v897, 32
  %v900 = vpop.permute.xlu0 %899
  %v902 = vadd.f32 %v892, %v900
  %v903 = vtanh.pop %v902
  %905 = vrot.lane.b32.xlu0 %v903, 64
  %v906 = vpop.permute.xlu0 %905
  %v908 = vmul.f32 %v890, %v906
  %v909 = vpack.c.bf16 %v908, %v908
  %v910 = vpack.c.bf16 %v843, %v843
  %912 = vrot.lane.b32.xlu0 %v910, 32
  %v913 = vpop.permute.xlu0 %912
  %v915 = vsel %vm87, %v913, 0
  %917 = vmatprep.subr.bf16.mxu0 0
  %918 = vmatpush1.bf16.msra.mxu0 %v165
  %919 = vmatprep.subr.bf16.mxu0 0
  %920 = vmatpush1.bf16.msra.mxu0 %v166
  %921 = vmatprep.subr.bf16.mxu0 0
  %922 = vmatpush1.bf16.msra.mxu0 0
  %923 = vmatprep.subr.bf16.mxu0 0
  %924 = vmatpush1.bf16.msra.mxu0 0
  %925 = vmatprep.subr.bf16.mxu0 0
  %926 = vmatpush1.bf16.msra.mxu0 0
  %927 = vmatprep.subr.bf16.mxu0 0
  %928 = vmatpush1.bf16.msra.mxu0 0
  %929 = vmatprep.subr.bf16.mxu0 0
  %930 = vmatpush1.bf16.msra.mxu0 0
  %931 = vmatprep.subr.bf16.mxu0 0
  %932 = vmatpush1.bf16.msra.mxu0 0
  %933 = vmatprep.subr.bf16.mxu0 0
  %934 = vmatpush1.bf16.msra.mxu0 0
  %935 = vmatprep.subr.bf16.mxu0 0
  %936 = vmatpush1.bf16.msra.mxu0 0
  %937 = vmatprep.subr.bf16.mxu0 0
  %938 = vmatpush1.bf16.msra.mxu0 0
  %939 = vmatprep.subr.bf16.mxu0 0
  %940 = vmatpush1.bf16.msra.mxu0 0
  %941 = vmatprep.subr.bf16.mxu0 0
  %942 = vmatpush1.bf16.msra.mxu0 0
  %943 = vmatprep.subr.bf16.mxu0 0
  %944 = vmatpush1.bf16.msra.mxu0 0
  %945 = vmatprep.subr.bf16.mxu0 0
  %946 = vmatpush1.bf16.msra.mxu0 0
  %947 = vmatprep.subr.bf16.mxu0 0
  %948 = vmatpush1.bf16.msra.mxu0 0
  %949 = vmatprep.mubr.bf16.mxu0 0
  %950 = vmatmul.mubr.bf16.gmra.mrb[0].mxu0 %v915
  %v951 = vpop.f32.mrb[0].mxu0
  %v952 = vadd.f32 0.0, %v951
  %v953 = vpop.f32.mrb[0].mxu0
  %v954 = vpop.f32.mrb[0].mxu0
  %v955 = vpop.f32.mrb[0].mxu0
  %956 = vdwg.mxu0
  %958 = vrot.lane.b32.xlu0 %v909, 32
  %v959 = vpop.permute.xlu0 %958
  %v961 = vsel %vm87, %v959, 0
  %963 = vmatprep.subr.bf16.mxu0 0
  %964 = vmatpush1.bf16.msra.mxu0 %v220
  %965 = vmatprep.subr.bf16.mxu0 0
  %966 = vmatpush1.bf16.msra.mxu0 %v221
  %967 = vmatprep.subr.bf16.mxu0 0
  %968 = vmatpush1.bf16.msra.mxu0 0
  %969 = vmatprep.subr.bf16.mxu0 0
  %970 = vmatpush1.bf16.msra.mxu0 0
  %971 = vmatprep.subr.bf16.mxu0 0
  %972 = vmatpush1.bf16.msra.mxu0 0
  %973 = vmatprep.subr.bf16.mxu0 0
  %974 = vmatpush1.bf16.msra.mxu0 0
  %975 = vmatprep.subr.bf16.mxu0 0
  %976 = vmatpush1.bf16.msra.mxu0 0
  %977 = vmatprep.subr.bf16.mxu0 0
  %978 = vmatpush1.bf16.msra.mxu0 0
  %979 = vmatprep.subr.bf16.mxu0 0
  %980 = vmatpush1.bf16.msra.mxu0 0
  %981 = vmatprep.subr.bf16.mxu0 0
  %982 = vmatpush1.bf16.msra.mxu0 0
  %983 = vmatprep.subr.bf16.mxu0 0
  %984 = vmatpush1.bf16.msra.mxu0 0
  %985 = vmatprep.subr.bf16.mxu0 0
  %986 = vmatpush1.bf16.msra.mxu0 0
  %987 = vmatprep.subr.bf16.mxu0 0
  %988 = vmatpush1.bf16.msra.mxu0 0
  %989 = vmatprep.subr.bf16.mxu0 0
  %990 = vmatpush1.bf16.msra.mxu0 0
  %991 = vmatprep.subr.bf16.mxu0 0
  %992 = vmatpush1.bf16.msra.mxu0 0
  %993 = vmatprep.subr.bf16.mxu0 0
  %994 = vmatpush1.bf16.msra.mxu0 0
  %995 = vmatprep.mubr.bf16.mxu0 0
  %996 = vmatmul.mubr.bf16.gmra.mrb[0].mxu0 %v961
  %v997 = vpop.f32.mrb[0].mxu0
  %v998 = vadd.f32 %v952, %v997
  %v999 = vpop.f32.mrb[0].mxu0
  %v1000 = vpop.f32.mrb[0].mxu0
  %v1001 = vpop.f32.mrb[0].mxu0
  %1002 = vdwg.mxu0
  %v1003 = vadd.f32 %v998, %v26
  %v1004 = vxor.u32 %v1003, 2147483648
  %v1005 = vmul.f32 %v1004, 1.442695
  %v1006 = vpow.pop %v1005
  %v1007 = vadd.f32 %v1006, 1.0
  %v1008 = vrcp.pop %v1007
  %v1009 = vmul.f32 1.0, %v1008
  %v1010 = vtanh.pop %v1003
  %v1011 = vmul.f32 %v1009, %v837
  %1013 = vrot.lane.b32.xlu0 %v1010, 64
  %v1014 = vpop.permute.xlu0 %1013
  %v1016 = vmul.f32 %v1009, %v1014
  %1018 = vrot.lane.b32.xlu0 %v1016, 32
  %v1019 = vpop.permute.xlu0 %1018
  %v1021 = vadd.f32 %v1011, %v1019
  %v1022 = vtanh.pop %v1021
  %1024 = vrot.lane.b32.xlu0 %v1022, 64
  %v1025 = vpop.permute.xlu0 %1024
  %v1027 = vmul.f32 %v1009, %v1025
  %1028 = vmatprep.subr.bf16.mxu0 0
  %1029 = vmatpush1.bf16.msra.mxu0 %v83
  %1030 = vmatprep.subr.bf16.mxu0 0
  %1031 = vmatpush1.bf16.msra.mxu0 %v84
  %1032 = vmatprep.subr.bf16.mxu0 0
  %1033 = vmatpush1.bf16.msra.mxu0 0
  %1034 = vmatprep.subr.bf16.mxu0 0
  %1035 = vmatpush1.bf16.msra.mxu0 0
  %1036 = vmatprep.subr.bf16.mxu0 0
  %1037 = vmatpush1.bf16.msra.mxu0 0
  %1038 = vmatprep.subr.bf16.mxu0 0
  %1039 = vmatpush1.bf16.msra.mxu0 0
  %1040 = vmatprep.subr.bf16.mxu0 0
  %1041 = vmatpush1.bf16.msra.mxu0 0
  %1042 = vmatprep.subr.bf16.mxu0 0
  %1043 = vmatpush1.bf16.msra.mxu0 0
  %1044 = vmatprep.subr.bf16.mxu0 0
  %1045 = vmatpush1.bf16.msra.mxu0 0
  %1046 = vmatprep.subr.bf16.mxu0 0
  %1047 = vmatpush1.bf16.msra.mxu0 0
  %1048 = vmatprep.subr.bf16.mxu0 0
  %1049 = vmatpush1.bf16.msra.mxu0 0
  %1050 = vmatprep.subr.bf16.mxu0 0
  %1051 = vmatpush1.bf16.msra.mxu0 0
  %1052 = vmatprep.subr.bf16.mxu0 0
  %1053 = vmatpush1.bf16.msra.mxu0 0
  %1054 = vmatprep.subr.bf16.mxu0 0
  %1055 = vmatpush1.bf16.msra.mxu0 0
  %1056 = vmatprep.subr.bf16.mxu0 0
  %1057 = vmatpush1.bf16.msra.mxu0 0
  %1058 = vmatprep.subr.bf16.mxu0 0
  %1059 = vmatpush1.bf16.msra.mxu0 0
  %1060 = vmatprep.mubr.bf16.mxu0 0
  %1061 = vmatmul.mubr.bf16.gmra.mrb[0].mxu0 %v961
  %v1062 = vpop.f32.mrb[0].mxu0
  %v1063 = vadd.f32 0.0, %v1062
  %v1064 = vpop.f32.mrb[0].mxu0
  %v1065 = vpop.f32.mrb[0].mxu0
  %v1066 = vpop.f32.mrb[0].mxu0
  %1067 = vdwg.mxu0
  %v1068 = vadd.f32 %v72, %v1063
  %v1069 = vxor.u32 %v1068, 2147483648
  %v1070 = vmul.f32 %v1069, 1.442695
  %v1071 = vpow.pop %v1070
  %v1072 = vadd.f32 %v1071, 1.0
  %v1073 = vrcp.pop %v1072
  %v1074 = vmul.f32 1.0, %v1073
  %v1075 = vtanh.pop %v1068
  %v1076 = vmul.f32 %v1074, %v902
  %1078 = vrot.lane.b32.xlu0 %v1075, 64
  %v1079 = vpop.permute.xlu0 %1078
  %v1081 = vmul.f32 %v1074, %v1079
  %1083 = vrot.lane.b32.xlu0 %v1081, 32
  %v1084 = vpop.permute.xlu0 %1083
  %v1086 = vadd.f32 %v1076, %v1084
  %v1087 = vtanh.pop %v1086
  %1089 = vrot.lane.b32.xlu0 %v1087, 64
  %v1090 = vpop.permute.xlu0 %1089
  %v1092 = vmul.f32 %v1074, %v1090
  %v1093 = vpack.c.bf16 %v1092, %v1092
  %v1094 = vpack.c.bf16 %v1027, %v1027
  %1096 = vrot.lane.b32.xlu0 %v1094, 32
  %v1097 = vpop.permute.xlu0 %1096
  %v1099 = vsel %vm87, %v1097, 0
  %1101 = vmatprep.subr.bf16.mxu0 0
  %1102 = vmatpush1.bf16.msra.mxu0 %v165
  %1103 = vmatprep.subr.bf16.mxu0 0
  %1104 = vmatpush1.bf16.msra.mxu0 %v166
  %1105 = vmatprep.subr.bf16.mxu0 0
  %1106 = vmatpush1.bf16.msra.mxu0 0
  %1107 = vmatprep.subr.bf16.mxu0 0
  %1108 = vmatpush1.bf16.msra.mxu0 0
  %1109 = vmatprep.subr.bf16.mxu0 0
  %1110 = vmatpush1.bf16.msra.mxu0 0
  %1111 = vmatprep.subr.bf16.mxu0 0
  %1112 = vmatpush1.bf16.msra.mxu0 0
  %1113 = vmatprep.subr.bf16.mxu0 0
  %1114 = vmatpush1.bf16.msra.mxu0 0
  %1115 = vmatprep.subr.bf16.mxu0 0
  %1116 = vmatpush1.bf16.msra.mxu0 0
  %1117 = vmatprep.subr.bf16.mxu0 0
  %1118 = vmatpush1.bf16.msra.mxu0 0
  %1119 = vmatprep.subr.bf16.mxu0 0
  %1120 = vmatpush1.bf16.msra.mxu0 0
  %1121 = vmatprep.subr.bf16.mxu0 0
  %1122 = vmatpush1.bf16.msra.mxu0 0
  %1123 = vmatprep.subr.bf16.mxu0 0
  %1124 = vmatpush1.bf16.msra.mxu0 0
  %1125 = vmatprep.subr.bf16.mxu0 0
  %1126 = vmatpush1.bf16.msra.mxu0 0
  %1127 = vmatprep.subr.bf16.mxu0 0
  %1128 = vmatpush1.bf16.msra.mxu0 0
  %1129 = vmatprep.subr.bf16.mxu0 0
  %1130 = vmatpush1.bf16.msra.mxu0 0
  %1131 = vmatprep.subr.bf16.mxu0 0
  %1132 = vmatpush1.bf16.msra.mxu0 0
  %1133 = vmatprep.mubr.bf16.mxu0 0
  %1134 = vmatmul.mubr.bf16.gmra.mrb[0].mxu0 %v1099
  %v1135 = vpop.f32.mrb[0].mxu0
  %v1136 = vadd.f32 0.0, %v1135
  %v1137 = vpop.f32.mrb[0].mxu0
  %v1138 = vpop.f32.mrb[0].mxu0
  %v1139 = vpop.f32.mrb[0].mxu0
  %1140 = vdwg.mxu0
  %1142 = vrot.lane.b32.xlu0 %v1093, 32
  %v1143 = vpop.permute.xlu0 %1142
  %v1145 = vsel %vm87, %v1143, 0
  %1147 = vmatprep.subr.bf16.mxu0 0
  %1148 = vmatpush1.bf16.msra.mxu0 %v220
  %1149 = vmatprep.subr.bf16.mxu0 0
  %1150 = vmatpush1.bf16.msra.mxu0 %v221
  %1151 = vmatprep.subr.bf16.mxu0 0
  %1152 = vmatpush1.bf16.msra.mxu0 0
  %1153 = vmatprep.subr.bf16.mxu0 0
  %1154 = vmatpush1.bf16.msra.mxu0 0
  %1155 = vmatprep.subr.bf16.mxu0 0
  %1156 = vmatpush1.bf16.msra.mxu0 0
  %1157 = vmatprep.subr.bf16.mxu0 0
  %1158 = vmatpush1.bf16.msra.mxu0 0
  %1159 = vmatprep.subr.bf16.mxu0 0
  %1160 = vmatpush1.bf16.msra.mxu0 0
  %1161 = vmatprep.subr.bf16.mxu0 0
  %1162 = vmatpush1.bf16.msra.mxu0 0
  %1163 = vmatprep.subr.bf16.mxu0 0
  %1164 = vmatpush1.bf16.msra.mxu0 0
  %1165 = vmatprep.subr.bf16.mxu0 0
  %1166 = vmatpush1.bf16.msra.mxu0 0
  %1167 = vmatprep.subr.bf16.mxu0 0
  %1168 = vmatpush1.bf16.msra.mxu0 0
  %1169 = vmatprep.subr.bf16.mxu0 0
  %1170 = vmatpush1.bf16.msra.mxu0 0
  %1171 = vmatprep.subr.bf16.mxu0 0
  %1172 = vmatpush1.bf16.msra.mxu0 0
  %1173 = vmatprep.subr.bf16.mxu0 0
  %1174 = vmatpush1.bf16.msra.mxu0 0
  %1175 = vmatprep.subr.bf16.mxu0 0
  %1176 = vmatpush1.bf16.msra.mxu0 0
  %1177 = vmatprep.subr.bf16.mxu0 0
  %1178 = vmatpush1.bf16.msra.mxu0 0
  %1179 = vmatprep.mubr.bf16.mxu0 0
  %1180 = vmatmul.mubr.bf16.gmra.mrb[0].mxu0 %v1145
  %v1181 = vpop.f32.mrb[0].mxu0
  %v1182 = vadd.f32 %v1136, %v1181
  %v1183 = vpop.f32.mrb[0].mxu0
  %v1184 = vpop.f32.mrb[0].mxu0
  %v1185 = vpop.f32.mrb[0].mxu0
  %1186 = vdwg.mxu0
  %v1187 = vadd.f32 %v1182, %v26
  %v1188 = vxor.u32 %v1187, 2147483648
  %v1189 = vmul.f32 %v1188, 1.442695
  %v1190 = vpow.pop %v1189
  %v1191 = vadd.f32 %v1190, 1.0
  %v1192 = vrcp.pop %v1191
  %v1193 = vmul.f32 1.0, %v1192
  %v1194 = vtanh.pop %v1187
  %v1195 = vmul.f32 %v1193, %v1021
  %1197 = vrot.lane.b32.xlu0 %v1194, 64
  %v1198 = vpop.permute.xlu0 %1197
  %v1200 = vmul.f32 %v1193, %v1198
  %1202 = vrot.lane.b32.xlu0 %v1200, 32
  %v1203 = vpop.permute.xlu0 %1202
  %v1205 = vadd.f32 %v1195, %v1203
  %v1206 = vtanh.pop %v1205
  %1208 = vrot.lane.b32.xlu0 %v1206, 64
  %v1209 = vpop.permute.xlu0 %1208
  %v1211 = vmul.f32 %v1193, %v1209
  %1212 = vmatprep.subr.bf16.mxu0 0
  %1213 = vmatpush1.bf16.msra.mxu0 %v83
  %1214 = vmatprep.subr.bf16.mxu0 0
  %1215 = vmatpush1.bf16.msra.mxu0 %v84
  %1216 = vmatprep.subr.bf16.mxu0 0
  %1217 = vmatpush1.bf16.msra.mxu0 0
  %1218 = vmatprep.subr.bf16.mxu0 0
  %1219 = vmatpush1.bf16.msra.mxu0 0
  %1220 = vmatprep.subr.bf16.mxu0 0
  %1221 = vmatpush1.bf16.msra.mxu0 0
  %1222 = vmatprep.subr.bf16.mxu0 0
  %1223 = vmatpush1.bf16.msra.mxu0 0
  %1224 = vmatprep.subr.bf16.mxu0 0
  %1225 = vmatpush1.bf16.msra.mxu0 0
  %1226 = vmatprep.subr.bf16.mxu0 0
  %1227 = vmatpush1.bf16.msra.mxu0 0
  %1228 = vmatprep.subr.bf16.mxu0 0
  %1229 = vmatpush1.bf16.msra.mxu0 0
  %1230 = vmatprep.subr.bf16.mxu0 0
  %1231 = vmatpush1.bf16.msra.mxu0 0
  %1232 = vmatprep.subr.bf16.mxu0 0
  %1233 = vmatpush1.bf16.msra.mxu0 0
  %1234 = vmatprep.subr.bf16.mxu0 0
  %1235 = vmatpush1.bf16.msra.mxu0 0
  %1236 = vmatprep.subr.bf16.mxu0 0
  %1237 = vmatpush1.bf16.msra.mxu0 0
  %1238 = vmatprep.subr.bf16.mxu0 0
  %1239 = vmatpush1.bf16.msra.mxu0 0
  %1240 = vmatprep.subr.bf16.mxu0 0
  %1241 = vmatpush1.bf16.msra.mxu0 0
  %1242 = vmatprep.subr.bf16.mxu0 0
  %1243 = vmatpush1.bf16.msra.mxu0 0
  %1244 = vmatprep.mubr.bf16.mxu0 0
  %1245 = vmatmul.mubr.bf16.gmra.mrb[0].mxu0 %v1145
  %v1246 = vpop.f32.mrb[0].mxu0
  %v1247 = vadd.f32 0.0, %v1246
  %v1248 = vpop.f32.mrb[0].mxu0
  %v1249 = vpop.f32.mrb[0].mxu0
  %v1250 = vpop.f32.mrb[0].mxu0
  %1251 = vdwg.mxu0
  %v1252 = vadd.f32 %v73, %v1247
  %v1253 = vxor.u32 %v1252, 2147483648
  %v1254 = vmul.f32 %v1253, 1.442695
  %v1255 = vpow.pop %v1254
  %v1256 = vadd.f32 %v1255, 1.0
  %v1257 = vrcp.pop %v1256
  %v1258 = vmul.f32 1.0, %v1257
  %v1259 = vtanh.pop %v1252
  %v1260 = vmul.f32 %v1258, %v1086
  %1262 = vrot.lane.b32.xlu0 %v1259, 64
  %v1263 = vpop.permute.xlu0 %1262
  %v1265 = vmul.f32 %v1258, %v1263
  %1267 = vrot.lane.b32.xlu0 %v1265, 32
  %v1268 = vpop.permute.xlu0 %1267
  %v1270 = vadd.f32 %v1260, %v1268
  %v1271 = vtanh.pop %v1270
  %1273 = vrot.lane.b32.xlu0 %v1271, 64
  %v1274 = vpop.permute.xlu0 %1273
  %v1276 = vmul.f32 %v1258, %v1274
  %v1277 = vpack.c.bf16 %v1276, %v1276
  %v1278 = vpack.c.bf16 %v1211, %v1211
  %1280 = vrot.lane.b32.xlu0 %v1278, 32
  %v1281 = vpop.permute.xlu0 %1280
  %v1283 = vsel %vm87, %v1281, 0
  %1285 = vmatprep.subr.bf16.mxu0 0
  %1286 = vmatpush1.bf16.msra.mxu0 %v165
  %1287 = vmatprep.subr.bf16.mxu0 0
  %1288 = vmatpush1.bf16.msra.mxu0 %v166
  %1289 = vmatprep.subr.bf16.mxu0 0
  %1290 = vmatpush1.bf16.msra.mxu0 0
  %1291 = vmatprep.subr.bf16.mxu0 0
  %1292 = vmatpush1.bf16.msra.mxu0 0
  %1293 = vmatprep.subr.bf16.mxu0 0
  %1294 = vmatpush1.bf16.msra.mxu0 0
  %1295 = vmatprep.subr.bf16.mxu0 0
  %1296 = vmatpush1.bf16.msra.mxu0 0
  %1297 = vmatprep.subr.bf16.mxu0 0
  %1298 = vmatpush1.bf16.msra.mxu0 0
  %1299 = vmatprep.subr.bf16.mxu0 0
  %1300 = vmatpush1.bf16.msra.mxu0 0
  %1301 = vmatprep.subr.bf16.mxu0 0
  %1302 = vmatpush1.bf16.msra.mxu0 0
  %1303 = vmatprep.subr.bf16.mxu0 0
  %1304 = vmatpush1.bf16.msra.mxu0 0
  %1305 = vmatprep.subr.bf16.mxu0 0
  %1306 = vmatpush1.bf16.msra.mxu0 0
  %1307 = vmatprep.subr.bf16.mxu0 0
  %1308 = vmatpush1.bf16.msra.mxu0 0
  %1309 = vmatprep.subr.bf16.mxu0 0
  %1310 = vmatpush1.bf16.msra.mxu0 0
  %1311 = vmatprep.subr.bf16.mxu0 0
  %1312 = vmatpush1.bf16.msra.mxu0 0
  %1313 = vmatprep.subr.bf16.mxu0 0
  %1314 = vmatpush1.bf16.msra.mxu0 0
  %1315 = vmatprep.subr.bf16.mxu0 0
  %1316 = vmatpush1.bf16.msra.mxu0 0
  %1317 = vmatprep.mubr.bf16.mxu0 0
  %1318 = vmatmul.mubr.bf16.gmra.mrb[0].mxu0 %v1283
  %v1319 = vpop.f32.mrb[0].mxu0
  %v1320 = vadd.f32 0.0, %v1319
  %v1321 = vpop.f32.mrb[0].mxu0
  %v1322 = vpop.f32.mrb[0].mxu0
  %v1323 = vpop.f32.mrb[0].mxu0
  %1324 = vdwg.mxu0
  %1326 = vrot.lane.b32.xlu0 %v1277, 32
  %v1327 = vpop.permute.xlu0 %1326
  %v1329 = vsel %vm87, %v1327, 0
  %1331 = vmatprep.subr.bf16.mxu0 0
  %1332 = vmatpush1.bf16.msra.mxu0 %v220
  %1333 = vmatprep.subr.bf16.mxu0 0
  %1334 = vmatpush1.bf16.msra.mxu0 %v221
  %1335 = vmatprep.subr.bf16.mxu0 0
  %1336 = vmatpush1.bf16.msra.mxu0 0
  %1337 = vmatprep.subr.bf16.mxu0 0
  %1338 = vmatpush1.bf16.msra.mxu0 0
  %1339 = vmatprep.subr.bf16.mxu0 0
  %1340 = vmatpush1.bf16.msra.mxu0 0
  %1341 = vmatprep.subr.bf16.mxu0 0
  %1342 = vmatpush1.bf16.msra.mxu0 0
  %1343 = vmatprep.subr.bf16.mxu0 0
  %1344 = vmatpush1.bf16.msra.mxu0 0
  %1345 = vmatprep.subr.bf16.mxu0 0
  %1346 = vmatpush1.bf16.msra.mxu0 0
  %1347 = vmatprep.subr.bf16.mxu0 0
  %1348 = vmatpush1.bf16.msra.mxu0 0
  %1349 = vmatprep.subr.bf16.mxu0 0
  %1350 = vmatpush1.bf16.msra.mxu0 0
  %1351 = vmatprep.subr.bf16.mxu0 0
  %1352 = vmatpush1.bf16.msra.mxu0 0
  %1353 = vmatprep.subr.bf16.mxu0 0
  %1354 = vmatpush1.bf16.msra.mxu0 0
  %1355 = vmatprep.subr.bf16.mxu0 0
  %1356 = vmatpush1.bf16.msra.mxu0 0
  %1357 = vmatprep.subr.bf16.mxu0 0
  %1358 = vmatpush1.bf16.msra.mxu0 0
  %1359 = vmatprep.subr.bf16.mxu0 0
  %1360 = vmatpush1.bf16.msra.mxu0 0
  %1361 = vmatprep.subr.bf16.mxu0 0
  %1362 = vmatpush1.bf16.msra.mxu0 0
  %1363 = vmatprep.mubr.bf16.mxu0 0
  %1364 = vmatmul.mubr.bf16.gmra.mrb[0].mxu0 %v1329
  %v1365 = vpop.f32.mrb[0].mxu0
  %v1366 = vadd.f32 %v1320, %v1365
  %v1367 = vpop.f32.mrb[0].mxu0
  %v1368 = vpop.f32.mrb[0].mxu0
  %v1369 = vpop.f32.mrb[0].mxu0
  %1370 = vdwg.mxu0
  %v1371 = vadd.f32 %v1366, %v26
  %v1372 = vxor.u32 %v1371, 2147483648
  %v1373 = vmul.f32 %v1372, 1.442695
  %v1374 = vpow.pop %v1373
  %v1375 = vadd.f32 %v1374, 1.0
  %v1376 = vrcp.pop %v1375
  %v1377 = vmul.f32 1.0, %v1376
  %v1378 = vtanh.pop %v1371
  %v1379 = vmul.f32 %v1377, %v1205
  %1381 = vrot.lane.b32.xlu0 %v1378, 64
  %v1382 = vpop.permute.xlu0 %1381
  %v1384 = vmul.f32 %v1377, %v1382
  %1386 = vrot.lane.b32.xlu0 %v1384, 32
  %v1387 = vpop.permute.xlu0 %1386
  %v1389 = vadd.f32 %v1379, %v1387
  %v1390 = vtanh.pop %v1389
  %1392 = vrot.lane.b32.xlu0 %v1390, 64
  %v1393 = vpop.permute.xlu0 %1392
  %v1395 = vmul.f32 %v1377, %v1393
  %1396 = vmatprep.subr.bf16.mxu0 0
  %1397 = vmatpush1.bf16.msra.mxu0 %v83
  %1398 = vmatprep.subr.bf16.mxu0 0
  %1399 = vmatpush1.bf16.msra.mxu0 %v84
  %1400 = vmatprep.subr.bf16.mxu0 0
  %1401 = vmatpush1.bf16.msra.mxu0 0
  %1402 = vmatprep.subr.bf16.mxu0 0
  %1403 = vmatpush1.bf16.msra.mxu0 0
  %1404 = vmatprep.subr.bf16.mxu0 0
  %1405 = vmatpush1.bf16.msra.mxu0 0
  %1406 = vmatprep.subr.bf16.mxu0 0
  %1407 = vmatpush1.bf16.msra.mxu0 0
  %1408 = vmatprep.subr.bf16.mxu0 0
  %1409 = vmatpush1.bf16.msra.mxu0 0
  %1410 = vmatprep.subr.bf16.mxu0 0
  %1411 = vmatpush1.bf16.msra.mxu0 0
  %1412 = vmatprep.subr.bf16.mxu0 0
  %1413 = vmatpush1.bf16.msra.mxu0 0
  %1414 = vmatprep.subr.bf16.mxu0 0
  %1415 = vmatpush1.bf16.msra.mxu0 0
  %1416 = vmatprep.subr.bf16.mxu0 0
  %1417 = vmatpush1.bf16.msra.mxu0 0
  %1418 = vmatprep.subr.bf16.mxu0 0
  %1419 = vmatpush1.bf16.msra.mxu0 0
  %1420 = vmatprep.subr.bf16.mxu0 0
  %1421 = vmatpush1.bf16.msra.mxu0 0
  %1422 = vmatprep.subr.bf16.mxu0 0
  %1423 = vmatpush1.bf16.msra.mxu0 0
  %1424 = vmatprep.subr.bf16.mxu0 0
  %1425 = vmatpush1.bf16.msra.mxu0 0
  %1426 = vmatprep.subr.bf16.mxu0 0
  %1427 = vmatpush1.bf16.msra.mxu0 0
  %1428 = vmatprep.mubr.bf16.mxu0 0
  %1429 = vmatmul.mubr.bf16.gmra.mrb[0].mxu0 %v1329
  %v1430 = vpop.f32.mrb[0].mxu0
  %v1431 = vadd.f32 0.0, %v1430
  %v1432 = vpop.f32.mrb[0].mxu0
  %v1433 = vpop.f32.mrb[0].mxu0
  %v1434 = vpop.f32.mrb[0].mxu0
  %1435 = vdwg.mxu0
  %v1436 = vadd.f32 %v74, %v1431
  %v1437 = vxor.u32 %v1436, 2147483648
  %v1438 = vmul.f32 %v1437, 1.442695
  %v1439 = vpow.pop %v1438
  %v1440 = vadd.f32 %v1439, 1.0
  %v1441 = vrcp.pop %v1440
  %v1442 = vmul.f32 1.0, %v1441
  %v1443 = vtanh.pop %v1436
  %v1444 = vmul.f32 %v1442, %v1270
  %1446 = vrot.lane.b32.xlu0 %v1443, 64
  %v1447 = vpop.permute.xlu0 %1446
  %v1449 = vmul.f32 %v1442, %v1447
  %1451 = vrot.lane.b32.xlu0 %v1449, 32
  %v1452 = vpop.permute.xlu0 %1451
  %v1454 = vadd.f32 %v1444, %v1452
  %v1455 = vtanh.pop %v1454
  %1457 = vrot.lane.b32.xlu0 %v1455, 64
  %v1458 = vpop.permute.xlu0 %1457
  %v1460 = vmul.f32 %v1442, %v1458
  %v1461 = vpack.c.bf16 %v1460, %v1460
  %v1462 = vpack.c.bf16 %v1395, %v1395
  %1464 = vrot.lane.b32.xlu0 %v1462, 32
  %v1465 = vpop.permute.xlu0 %1464
  %v1467 = vsel %vm87, %v1465, 0
  %1469 = vmatprep.subr.bf16.mxu0 0
  %1470 = vmatpush1.bf16.msra.mxu0 %v165
  %1471 = vmatprep.subr.bf16.mxu0 0
  %1472 = vmatpush1.bf16.msra.mxu0 %v166
  %1473 = vmatprep.subr.bf16.mxu0 0
  %1474 = vmatpush1.bf16.msra.mxu0 0
  %1475 = vmatprep.subr.bf16.mxu0 0
  %1476 = vmatpush1.bf16.msra.mxu0 0
  %1477 = vmatprep.subr.bf16.mxu0 0
  %1478 = vmatpush1.bf16.msra.mxu0 0
  %1479 = vmatprep.subr.bf16.mxu0 0
  %1480 = vmatpush1.bf16.msra.mxu0 0
  %1481 = vmatprep.subr.bf16.mxu0 0
  %1482 = vmatpush1.bf16.msra.mxu0 0
  %1483 = vmatprep.subr.bf16.mxu0 0
  %1484 = vmatpush1.bf16.msra.mxu0 0
  %1485 = vmatprep.subr.bf16.mxu0 0
  %1486 = vmatpush1.bf16.msra.mxu0 0
  %1487 = vmatprep.subr.bf16.mxu0 0
  %1488 = vmatpush1.bf16.msra.mxu0 0
  %1489 = vmatprep.subr.bf16.mxu0 0
  %1490 = vmatpush1.bf16.msra.mxu0 0
  %1491 = vmatprep.subr.bf16.mxu0 0
  %1492 = vmatpush1.bf16.msra.mxu0 0
  %1493 = vmatprep.subr.bf16.mxu0 0
  %1494 = vmatpush1.bf16.msra.mxu0 0
  %1495 = vmatprep.subr.bf16.mxu0 0
  %1496 = vmatpush1.bf16.msra.mxu0 0
  %1497 = vmatprep.subr.bf16.mxu0 0
  %1498 = vmatpush1.bf16.msra.mxu0 0
  %1499 = vmatprep.subr.bf16.mxu0 0
  %1500 = vmatpush1.bf16.msra.mxu0 0
  %1501 = vmatprep.mubr.bf16.mxu0 0
  %1502 = vmatmul.mubr.bf16.gmra.mrb[0].mxu0 %v1467
  %v1503 = vpop.f32.mrb[0].mxu0
  %v1504 = vadd.f32 0.0, %v1503
  %v1505 = vpop.f32.mrb[0].mxu0
  %v1506 = vpop.f32.mrb[0].mxu0
  %v1507 = vpop.f32.mrb[0].mxu0
  %1508 = vdwg.mxu0
  %1510 = vrot.lane.b32.xlu0 %v1461, 32
  %v1511 = vpop.permute.xlu0 %1510
  %v1513 = vsel %vm87, %v1511, 0
  %1515 = vmatprep.subr.bf16.mxu0 0
  %1516 = vmatpush1.bf16.msra.mxu0 %v220
  %1517 = vmatprep.subr.bf16.mxu0 0
  %1518 = vmatpush1.bf16.msra.mxu0 %v221
  %1519 = vmatprep.subr.bf16.mxu0 0
  %1520 = vmatpush1.bf16.msra.mxu0 0
  %1521 = vmatprep.subr.bf16.mxu0 0
  %1522 = vmatpush1.bf16.msra.mxu0 0
  %1523 = vmatprep.subr.bf16.mxu0 0
  %1524 = vmatpush1.bf16.msra.mxu0 0
  %1525 = vmatprep.subr.bf16.mxu0 0
  %1526 = vmatpush1.bf16.msra.mxu0 0
  %1527 = vmatprep.subr.bf16.mxu0 0
  %1528 = vmatpush1.bf16.msra.mxu0 0
  %1529 = vmatprep.subr.bf16.mxu0 0
  %1530 = vmatpush1.bf16.msra.mxu0 0
  %1531 = vmatprep.subr.bf16.mxu0 0
  %1532 = vmatpush1.bf16.msra.mxu0 0
  %1533 = vmatprep.subr.bf16.mxu0 0
  %1534 = vmatpush1.bf16.msra.mxu0 0
  %1535 = vmatprep.subr.bf16.mxu0 0
  %1536 = vmatpush1.bf16.msra.mxu0 0
  %1537 = vmatprep.subr.bf16.mxu0 0
  %1538 = vmatpush1.bf16.msra.mxu0 0
  %1539 = vmatprep.subr.bf16.mxu0 0
  %1540 = vmatpush1.bf16.msra.mxu0 0
  %1541 = vmatprep.subr.bf16.mxu0 0
  %1542 = vmatpush1.bf16.msra.mxu0 0
  %1543 = vmatprep.subr.bf16.mxu0 0
  %1544 = vmatpush1.bf16.msra.mxu0 0
  %1545 = vmatprep.subr.bf16.mxu0 0
  %1546 = vmatpush1.bf16.msra.mxu0 0
  %1547 = vmatprep.mubr.bf16.mxu0 0
  %1548 = vmatmul.mubr.bf16.gmra.mrb[0].mxu0 %v1513
  %v1549 = vpop.f32.mrb[0].mxu0
  %v1550 = vadd.f32 %v1504, %v1549
  %v1551 = vpop.f32.mrb[0].mxu0
  %v1552 = vpop.f32.mrb[0].mxu0
  %v1553 = vpop.f32.mrb[0].mxu0
  %1554 = vdwg.mxu0
  %v1555 = vadd.f32 %v1550, %v26
  %v1556 = vxor.u32 %v1555, 2147483648
  %v1557 = vmul.f32 %v1556, 1.442695
  %v1558 = vpow.pop %v1557
  %v1559 = vadd.f32 %v1558, 1.0
  %v1560 = vrcp.pop %v1559
  %v1561 = vmul.f32 1.0, %v1560
  %v1562 = vtanh.pop %v1555
  %v1563 = vmul.f32 %v1561, %v1389
  %1565 = vrot.lane.b32.xlu0 %v1562, 64
  %v1566 = vpop.permute.xlu0 %1565
  %v1568 = vmul.f32 %v1561, %v1566
  %1570 = vrot.lane.b32.xlu0 %v1568, 32
  %v1571 = vpop.permute.xlu0 %1570
  %v1573 = vadd.f32 %v1563, %v1571
  %v1574 = vtanh.pop %v1573
  %1576 = vrot.lane.b32.xlu0 %v1574, 64
  %v1577 = vpop.permute.xlu0 %1576
  %v1579 = vmul.f32 %v1561, %v1577
  %v1580 = vmax.f32 %v1579, 0.0
  %v1581 = vpack.c.bf16 %v1580, %v1580
  %1583 = vrot.lane.b32.xlu0 %v1581, 32
  %v1584 = vpop.permute.xlu0 %1583
  %v1589 = vunpack.c.l.b16 %v27
  %v1590 = vunpack.c.l.b16 %v28
  %v1591 = vunpack.c.l.b16 %v29
  %v1592 = vunpack.c.l.b16 %v30
  %v1593 = vpack.c.b16 %v1590, %v1589
  %v1594 = vpack.c.b16 %v1592, %v1591
  %v1598 = vsel %vm87, %v1584, 0
  %1600 = vmatprep.subr.bf16.mxu0 0
  %1601 = vmatpush1.bf16.msra.mxu0 %v1593
  %1602 = vmatprep.subr.bf16.mxu0 0
  %1603 = vmatpush1.bf16.msra.mxu0 %v1594
  %1604 = vmatprep.subr.bf16.mxu0 0
  %1605 = vmatpush1.bf16.msra.mxu0 0
  %1606 = vmatprep.subr.bf16.mxu0 0
  %1607 = vmatpush1.bf16.msra.mxu0 0
  %1608 = vmatprep.subr.bf16.mxu0 0
  %1609 = vmatpush1.bf16.msra.mxu0 0
  %1610 = vmatprep.subr.bf16.mxu0 0
  %1611 = vmatpush1.bf16.msra.mxu0 0
  %1612 = vmatprep.subr.bf16.mxu0 0
  %1613 = vmatpush1.bf16.msra.mxu0 0
  %1614 = vmatprep.subr.bf16.mxu0 0
  %1615 = vmatpush1.bf16.msra.mxu0 0
  %1616 = vmatprep.subr.bf16.mxu0 0
  %1617 = vmatpush1.bf16.msra.mxu0 0
  %1618 = vmatprep.subr.bf16.mxu0 0
  %1619 = vmatpush1.bf16.msra.mxu0 0
  %1620 = vmatprep.subr.bf16.mxu0 0
  %1621 = vmatpush1.bf16.msra.mxu0 0
  %1622 = vmatprep.subr.bf16.mxu0 0
  %1623 = vmatpush1.bf16.msra.mxu0 0
  %1624 = vmatprep.subr.bf16.mxu0 0
  %1625 = vmatpush1.bf16.msra.mxu0 0
  %1626 = vmatprep.subr.bf16.mxu0 0
  %1627 = vmatpush1.bf16.msra.mxu0 0
  %1628 = vmatprep.subr.bf16.mxu0 0
  %1629 = vmatpush1.bf16.msra.mxu0 0
  %1630 = vmatprep.subr.bf16.mxu0 0
  %1631 = vmatpush1.bf16.msra.mxu0 0
  %1632 = vmatprep.mubr.bf16.mxu0 0
  %1633 = vmatmul.mubr.bf16.gmra.mrb[0].mxu0 %v1598
  %v1634 = vpop.f32.mrb[0].mxu0
  %v1635 = vadd.f32 %v52, %v1634
  %v1636 = vpop.f32.mrb[0].mxu0
  %v1637 = vpop.f32.mrb[0].mxu0
  %v1638 = vpop.f32.mrb[0].mxu0
  %1639 = vdwg.mxu0
  %v1640 = vmax.f32 %v1635, 0.0
  %v1641 = vpack.c.bf16 %v1640, %v1640
  %v1658 = vunpack.c.l.b16 %v31
  %v1659 = vunpack.c.l.b16 %v32
  %v1660 = vunpack.c.l.b16 %v33
  %v1661 = vunpack.c.l.b16 %v34
  %v1662 = vunpack.c.l.b16 %v35
  %v1663 = vunpack.c.l.b16 %v36
  %v1664 = vunpack.c.l.b16 %v37
  %v1665 = vunpack.c.l.b16 %v38
  %v1666 = vunpack.c.l.b16 %v39
  %v1667 = vunpack.c.l.b16 %v40
  %v1668 = vunpack.c.l.b16 %v41
  %v1669 = vunpack.c.l.b16 %v42
  %v1670 = vunpack.c.l.b16 %v43
  %v1671 = vunpack.c.l.b16 %v44
  %v1672 = vunpack.c.l.b16 %v45
  %v1673 = vunpack.c.l.b16 %v46
  %v1674 = vpack.c.b16 %v1659, %v1658
  %v1675 = vpack.c.b16 %v1661, %v1660
  %v1676 = vpack.c.b16 %v1663, %v1662
  %v1677 = vpack.c.b16 %v1665, %v1664
  %v1678 = vpack.c.b16 %v1667, %v1666
  %v1679 = vpack.c.b16 %v1669, %v1668
  %v1680 = vpack.c.b16 %v1671, %v1670
  %v1681 = vpack.c.b16 %v1673, %v1672
  %1690 = vmatprep.subr.bf16.mxu0 0
  %1691 = vmatpush1.bf16.msra.mxu0 %v1674
  %1692 = vmatprep.subr.bf16.mxu0 0
  %1693 = vmatpush1.bf16.msra.mxu0 %v1675
  %1694 = vmatprep.subr.bf16.mxu0 0
  %1695 = vmatpush1.bf16.msra.mxu0 %v1676
  %1696 = vmatprep.subr.bf16.mxu0 0
  %1697 = vmatpush1.bf16.msra.mxu0 %v1677
  %1698 = vmatprep.subr.bf16.mxu0 0
  %1699 = vmatpush1.bf16.msra.mxu0 %v1678
  %1700 = vmatprep.subr.bf16.mxu0 0
  %1701 = vmatpush1.bf16.msra.mxu0 %v1679
  %1702 = vmatprep.subr.bf16.mxu0 0
  %1703 = vmatpush1.bf16.msra.mxu0 %v1680
  %1704 = vmatprep.subr.bf16.mxu0 0
  %1705 = vmatpush1.bf16.msra.mxu0 %v1681
  %1706 = vmatprep.subr.bf16.mxu0 0
  %1707 = vmatpush1.bf16.msra.mxu0 0
  %1708 = vmatprep.subr.bf16.mxu0 0
  %1709 = vmatpush1.bf16.msra.mxu0 0
  %1710 = vmatprep.subr.bf16.mxu0 0
  %1711 = vmatpush1.bf16.msra.mxu0 0
  %1712 = vmatprep.subr.bf16.mxu0 0
  %1713 = vmatpush1.bf16.msra.mxu0 0
  %1714 = vmatprep.subr.bf16.mxu0 0
  %1715 = vmatpush1.bf16.msra.mxu0 0
  %1716 = vmatprep.subr.bf16.mxu0 0
  %1717 = vmatpush1.bf16.msra.mxu0 0
  %1718 = vmatprep.subr.bf16.mxu0 0
  %1719 = vmatpush1.bf16.msra.mxu0 0
  %1720 = vmatprep.subr.bf16.mxu0 0
  %1721 = vmatpush1.bf16.msra.mxu0 0
  %1722 = vmatprep.mubr.bf16.mxu0 0
  %1723 = vmatmul.mubr.bf16.gmra.mrb[0].mxu0 %v1641
  %v1724 = vpop.f32.mrb[0].mxu0
  %v1725 = vadd.f32 %v58, %v1724
  %v1726 = vpop.f32.mrb[0].mxu0
  %v1727 = vpop.f32.mrb[0].mxu0
  %v1728 = vpop.f32.mrb[0].mxu0
  %1729 = vdwg.mxu0
  %1730 = vst [vmem:[%s1] sm:$0xff] %v1725
  // Predicated region
  $region6: #{forward.1} parent=0 // pred_check
    _
  $region7: #{forward.1} parent=0 // pred_check_branch
    %1732 = sbr.rel (0) target = $region9
  $region8: #{forward.1} parent=0 // pred_region
    _
  $region9: #{forward.1} parent=0 // pred_fallthru
    _
  // Predicated region
  $region10: #{forward.1} parent=0 // pred_check
    _
  $region11: #{forward.1} parent=0 // pred_check_branch
    %1734 = sbr.rel (0) target = $region13
  $region12: #{forward.1} parent=0 // pred_region
    _
  $region13: #{forward.1} parent=0 // pred_fallthru
    _

</llo_original>
